<compile_context>
chip_gen: v7x
topology: tpu7x:2x2x1
jax: 0.10.0
libtpu: 0.0.40
codegen_flags: <defaults>
</compile_context>

<pallas_src>
import numpy as np
import jax
import jax.numpy as jnp
from jax.experimental import pallas as pl
from jax.experimental.pallas import tpu as pltpu


# ----------------------------------------------------------------------------
# Anchor utilities (pure numpy glue, identical semantics to the reference)
# ----------------------------------------------------------------------------
def generate_anchor_base(base_size=16, ratios=(0.5, 1, 2), anchor_scales=(8, 16, 32)):
    py = base_size / 2.0
    px = base_size / 2.0
    anchor_base = np.zeros((len(ratios) * len(anchor_scales), 4), dtype=np.float32)
    for i in range(len(ratios)):
        for j in range(len(anchor_scales)):
            h = base_size * anchor_scales[j] * np.sqrt(ratios[i])
            w = base_size * anchor_scales[j] * np.sqrt(1.0 / ratios[i])
            index = i * len(anchor_scales) + j
            anchor_base[index, 0] = py - h / 2.0
            anchor_base[index, 1] = px - w / 2.0
            anchor_base[index, 2] = py + h / 2.0
            anchor_base[index, 3] = px + w / 2.0
    return anchor_base


def _enumerate_shifted_anchor(anchor_base, feat_stride, height, width):
    shift_y = np.arange(0, height * feat_stride, feat_stride)
    shift_x = np.arange(0, width * feat_stride, feat_stride)
    shift_x, shift_y = np.meshgrid(shift_x, shift_y)
    shift = np.stack(
        (shift_y.ravel(), shift_x.ravel(), shift_y.ravel(), shift_x.ravel()), axis=1
    )
    A = anchor_base.shape[0]
    K = shift.shape[0]
    anchor = anchor_base.reshape((1, A, 4)) + shift.reshape((1, K, 4)).transpose((1, 0, 2))
    anchor = anchor.reshape((K * A, 4)).astype(np.float32)
    return anchor


def _round_up(x, m):
    return ((x + m - 1) // m) * m


# ----------------------------------------------------------------------------
# Pallas kernel (one grid step = one batch element x one row tile)
# ----------------------------------------------------------------------------
def _rpn_kernel(x_ref, w1_ref, b1_ref, wh_ref, bh_ref, out_ref):
    # x_ref  : (1, tile_h+2, Wp, K)  dx-im2col'ed, haloed row slab (compute dtype)
    # w1_ref : (3, K, Cmid)          conv taps, dx packed along K per dy
    # b1_ref : (1, Cmid) f32
    # wh_ref : (Cmid, P)             fused [loc | score_bg | score_fg | 0] head
    # bh_ref : (1, P) f32
    # out_ref: (1, tile_h*Wp, P)     lane-dense fused output slab (compute dtype)
    tile_h = x_ref.shape[1] - 2
    wp = x_ref.shape[2]
    k = x_ref.shape[3]
    rows = tile_h * wp

    # 3x3 conv as 3 MXU matmuls (K = 3*Cin packed in the wrapper).  Each dy
    # slab is a leading-dim slice of the input block + a layout-free flatten;
    # the partials accumulate in a traced f32 value (no scratch round-trips).
    acc = None
    for dy in range(3):  # static unroll
        patch = x_ref[0, dy:dy + tile_h].reshape(rows, k)
        part = jnp.dot(patch, w1_ref[dy], preferred_element_type=jnp.float32)
        acc = part if acc is None else acc + part

    # Bias + ReLU in f32, cast to the matmul compute dtype for the fused head.
    h = jnp.maximum(acc + b1_ref[...], 0.0).astype(wh_ref.dtype)

    # Single fused 1x1 head: one MXU matmul, one lane-dense (>=128-wide) store.
    out = jnp.dot(h, wh_ref[...], preferred_element_type=jnp.float32) + bh_ref[...]
    out_ref[0] = out.astype(out_ref.dtype)


# ----------------------------------------------------------------------------
# Chip-aware tiling / VMEM heuristics
# ----------------------------------------------------------------------------
def _vmem_capacity_bytes():
    try:
        cap = int(pltpu.get_tpu_info().vmem_capacity_bytes)
        if cap > 0:
            return cap
    except Exception:
        pass
    return 64 << 20  # conservative (v7x-sized) fallback


def _tile_cost_bytes(tile_h, wp, kd, cmid, P, in_b, out_b):
    rows = tile_h * wp
    return (
        (tile_h + 2) * wp * kd * in_b * 2      # input slab, double buffered
        + rows * cmid * (4 + in_b)             # f32 conv accumulator + compute-dtype h
        + rows * P * (4 + 2 * out_b)           # f32 head result + output block (x2)
    )


def _fixed_bytes(kd, cmid, P, in_b):
    # Grid-invariant operands (constant index_map -> fetched once, but the
    # pipeline still allocates two buffers each).
    return (3 * kd * cmid + cmid * P) * in_b * 2 + (cmid + P) * 4 * 2


def _pick_tile_h(H, wp, kd, cmid, P, in_b, out_b, budget, force_split):
    divs = [d for d in range(H, 0, -1) if H % d == 0]
    if force_split and len(divs) > 1:
        divs = divs[1:]   # exclude tile_h == H so the grid has >= 2 steps (v7x: 2 TCs)
    for th in divs:
        if _tile_cost_bytes(th, wp, kd, cmid, P, in_b, out_b) <= budget:
            return th
    return divs[-1]


def _vmem_limit_bytes(tile_cost, fixed, cap):
    want = int(1.6 * (tile_cost + fixed))          # headroom for compiler scratch
    return int(min(int(0.82 * cap), max(32 << 20, want)))


# ----------------------------------------------------------------------------
# Wrapper
# ----------------------------------------------------------------------------
def rpn_forward_pallas(x_nchw, params, feat_stride, anchor_base, img_size,
                       scale=1.0, compute_dtype=jnp.bfloat16):
    """RPN forward. x_nchw: (N, Cin, H, W) float32 (PyTorch layout)."""
    n, cin, hh, ww = x_nchw.shape
    A = anchor_base.shape[0]
    cmid = params["w1"].shape[3]

    wp = _round_up(ww, 16)                    # width pad: free flattens + bf16 tiling
    kd = _round_up(3 * cin, 128)              # packed contraction dim (lane dense)
    P = _round_up(6 * A, 128)                 # fused head width (lane dense)
    in_b = jnp.dtype(compute_dtype).itemsize
    out_b = in_b                              # bf16 output stream

    cap = _vmem_capacity_bytes()
    fixed = _fixed_bytes(kd, cmid, P, in_b)
    budget = max(4 << 20, int(0.40 * cap) - fixed)
    force_split = (n == 1 and hh > 1)         # keep both v7x TensorCores busy
    tile_h = _pick_tile_h(hh, wp, kd, cmid, P, in_b, out_b, budget, force_split)
    n_tiles = hh // tile_h
    rows_t = tile_h * wp
    vmem_limit = _vmem_limit_bytes(
        _tile_cost_bytes(tile_h, wp, kd, cmid, P, in_b, out_b), fixed, cap)

    # ---- weight packing (tiny host-side jnp ops) ----
    # conv1 weight (3, 3, Cin, Cmid) -> (3, 3*Cin->K, Cmid): dx taps stacked on K.
    w1 = params["w1"].reshape(3, 3 * cin, cmid)
    w1 = jnp.pad(w1, ((0, 0), (0, kd - 3 * cin), (0, 0))).astype(compute_dtype)
    b1 = params["b1"].reshape(1, cmid).astype(jnp.float32)

    # Fused head: [loc (4A, order a*4+c) | score bg (A) | score fg (A) | zero pad].
    wloc, bloc = params["wloc"], params["bloc"]
    wsc, bsc = params["wsc"], params["bsc"]           # score channel order a*2 + k
    whead = jnp.concatenate(
        [wloc, wsc[:, 0::2], wsc[:, 1::2], jnp.zeros((cmid, P - 6 * A), jnp.float32)],
        axis=1,
    ).astype(compute_dtype)
    bhead = jnp.concatenate(
        [bloc, bsc[0::2], bsc[1::2], jnp.zeros((P - 6 * A,), jnp.float32)]
    ).reshape(1, P).astype(jnp.float32)

    cost = pl.CostEstimate(
        flops=int(2 * n * hh * wp * cmid * (3 * kd + P)),
        transcendentals=0,
        bytes_accessed=int(n * n_tiles * (tile_h + 2) * wp * kd * in_b
                           + (3 * kd * cmid + cmid * P) * in_b + (cmid + P) * 4
                           + n * hh * wp * P * out_b),
    )

    full = lambda shape: pl.BlockSpec(shape, lambda b, i: (0,) * len(shape))

    def _core(x_nchw, w1, b1, whead, bhead):
        # ---- fused layout glue: NCHW -> NHWC, pad, dx im2col, cast, tile ----
        x_nhwc = jnp.transpose(x_nchw, (0, 2, 3, 1)).astype(jnp.float32)
        x_pad = jnp.pad(x_nhwc, ((0, 0), (1, 1), (1, 1 + wp - ww), (0, 0)))
        x3 = jnp.concatenate(
            [x_pad[:, :, 0:wp], x_pad[:, :, 1:wp + 1], x_pad[:, :, 2:wp + 2]],
            axis=-1)                                            # dx im2col -> 3*Cin lanes
        x3 = jnp.pad(x3, ((0, 0), (0, 0), (0, 0), (0, kd - 3 * cin)))
        x3 = x3.astype(compute_dtype)                           # (n, H+2, Wp, K)

        if n_tiles == 1:
            x_tiles = x3                                        # no extra HBM copy
        else:
            # TODO(synk): overlapping halo row windows need a duplicated copy on
            # the auto-pipelined BlockSpec path; a manual-DMA (pl.ANY) variant
            # would avoid it but is unnecessary at typical RPN feature-map sizes.
            x_tiles = jnp.concatenate(
                [x3[:, i * tile_h:i * tile_h + tile_h + 2][:, None]
                 for i in range(n_tiles)], axis=1,
            ).reshape(n * n_tiles, tile_h + 2, wp, kd)

        out = pl.pallas_call(
            _rpn_kernel,
            out_shape=jax.ShapeDtypeStruct((n, n_tiles * rows_t, P), compute_dtype),
            grid_spec=pltpu.PrefetchScalarGridSpec(
                num_scalar_prefetch=0,
                grid=(n, n_tiles),
                in_specs=[
                    pl.BlockSpec((1, tile_h + 2, wp, kd),
                                 lambda b, i: (b * n_tiles + i, 0, 0, 0)),
                    full((3, kd, cmid)),
                    full((1, cmid)),
                    full((cmid, P)),
                    full((1, P)),
                ],
                out_specs=pl.BlockSpec((1, rows_t, P), lambda b, i: (b, i, 0)),
            ),
            compiler_params=pltpu.CompilerParams(
                dimension_semantics=("parallel", "parallel"),
                vmem_limit_bytes=vmem_limit,
            ),
            cost_estimate=cost,
        )(x_tiles, w1, b1, whead, bhead)

        # ---- fused output glue: drop width padding, slice fused slab ----
        out = out.reshape(n, hh, wp, P)[:, :, :ww, :].astype(jnp.float32)
        out = out.reshape(n, hh * ww, P)
        loc = out[:, :, :4 * A].reshape(n, hh * ww * A, 4)
        bg = out[:, :, 4 * A:5 * A]
        fg = out[:, :, 5 * A:6 * A]
        scores = jnp.stack([bg, fg], axis=-1).reshape(n, hh * ww * A, 2)
        # softmax([bg, fg])[..., 1] == sigmoid(fg - bg)
        fg_prob = jax.nn.sigmoid(fg - bg).reshape(n, hh * ww * A)
        return loc, scores, fg_prob

    rpn_locs, rpn_scores, rpn_fg_scores = jax.jit(_core)(x_nchw, w1, b1, whead, bhead)

    anchor = _enumerate_shifted_anchor(np.array(anchor_base), feat_stride, hh, ww)

    # TODO(synk): ProposalCreator (bbox decode + clip + score top-k + NMS) is a
    # host-side, data-dependent loop with no clean Pallas equivalent; rois empty.
    rois = np.zeros((0, 4), dtype=np.float32)
    roi_indices = np.zeros((0,), dtype=np.int32)

    return rpn_locs, rpn_scores, rois, roi_indices, anchor, rpn_fg_scores


# ----------------------------------------------------------------------------
# Pure-JAX reference (for correctness check of the kernel)
# ----------------------------------------------------------------------------
def rpn_forward_ref(x_nchw, params, A):
    n, cin, hh, ww = x_nchw.shape
    w1 = jnp.transpose(params["w1"], (3, 2, 0, 1))      # (Cmid, Cin, 3, 3) OIHW
    h = jax.lax.conv_general_dilated(
        x_nchw, w1, window_strides=(1, 1), padding="SAME",
        dimension_numbers=("NCHW", "OIHW", "NCHW"))
    h = jax.nn.relu(h + params["b1"].reshape(1, -1, 1, 1))

    def conv1x1(feat, w, b):  # w: (Cmid, Cout)
        return jnp.einsum("nchw,co->nohw", feat, w) + b.reshape(1, -1, 1, 1)

    loc = conv1x1(h, params["wloc"], params["bloc"])     # (n, 4A, H, W)
    sc = conv1x1(h, params["wsc"], params["bsc"])        # (n, 2A, H, W)

    rpn_locs = jnp.transpose(loc, (0, 2, 3, 1)).reshape(n, -1, 4)
    rpn_scores_nhwc = jnp.transpose(sc, (0, 2, 3, 1))
    soft = jax.nn.softmax(rpn_scores_nhwc.reshape(n, hh, ww, A, 2), axis=4)
    rpn_fg = soft[:, :, :, :, 1].reshape(n, -1)
    rpn_scores = rpn_scores_nhwc.reshape(n, -1, 2)
    return rpn_locs, rpn_scores, rpn_fg


if __name__ == "__main__":
    # Small deterministic config (scaled-down RPN).
    N, CIN, CMID, H, W = 2, 16, 32, 16, 16
    feat_stride = 16
    anchor_base = generate_anchor_base(ratios=(0.5, 1, 2), anchor_scales=(8, 16, 32))
    A = anchor_base.shape[0]  # 9

    key = jax.random.PRNGKey(0)
    k_x, k1, k2, k3 = jax.random.split(key, 4)

    # normal_init(mean=0, std=0.01), biases zero.
    params = {
        "w1": 0.01 * jax.random.normal(k1, (3, 3, CIN, CMID), dtype=jnp.float32),
        "b1": jnp.zeros((CMID,), dtype=jnp.float32),
        "wloc": 0.01 * jax.random.normal(k2, (CMID, A * 4), dtype=jnp.float32),
        "bloc": jnp.zeros((A * 4,), dtype=jnp.float32),
        "wsc": 0.01 * jax.random.normal(k3, (CMID, A * 2), dtype=jnp.float32),
        "bsc": jnp.zeros((A * 2,), dtype=jnp.float32),
    }
    x = jax.random.normal(k_x, (N, CIN, H, W), dtype=jnp.float32)  # NCHW like PyTorch

    # Pre-round operands to bf16 precision so the bf16-MXU kernel (f32 accum)
    # and the f32 reference see the same values; tolerances cover the residual
    # rounding of intermediate/output activations.
    rb = lambda a: a.astype(jnp.bfloat16).astype(jnp.float32)
    params = {k: rb(v) for k, v in params.items()}
    x = rb(x)

    img_size = (H * feat_stride, W * feat_stride)

    outs = rpn_forward_pallas(x, params, feat_stride, anchor_base, img_size, scale=1.0)
    rpn_locs, rpn_scores, rois, roi_indices, anchor, rpn_fg = outs
    jax.block_until_ready((rpn_locs, rpn_scores, rpn_fg))

    # Validate against pure-JAX reference.
    ref_locs, ref_scores, ref_fg = rpn_forward_ref(x, params, A)
    assert rpn_locs.shape == (N, H * W * A, 4)
    assert rpn_scores.shape == (N, H * W * A, 2)
    assert rpn_fg.shape == (N, H * W * A)
    assert anchor.shape == (H * W * A, 4)
    np.testing.assert_allclose(np.asarray(rpn_locs), np.asarray(ref_locs),
                               atol=2e-3, rtol=2e-2)
    np.testing.assert_allclose(np.asarray(rpn_scores), np.asarray(ref_scores),
                               atol=2e-3, rtol=2e-2)
    np.testing.assert_allclose(np.asarray(rpn_fg), np.asarray(ref_fg),
                               atol=2e-3, rtol=2e-2)

    print("KERNEL_OK")
</pallas_src>

<mosaic_0001>
module attributes {stable_mosaic.version = 11 : i64} {
  func.func @_rpn_kernel(%arg0: i32, %arg1: i32, %arg2: memref<1x18x16x128xbf16, #tpu.memory_space<vmem>>, %arg3: memref<3x128x32xbf16, #tpu.memory_space<vmem>>, %arg4: memref<1x32xf32, #tpu.memory_space<vmem>>, %arg5: memref<32x128xbf16, #tpu.memory_space<vmem>>, %arg6: memref<1x128xf32, #tpu.memory_space<vmem>>, %arg7: memref<1x256x128xbf16, #tpu.memory_space<vmem>>) attributes {dimension_semantics = [#tpu.dimension_semantics<parallel>, #tpu.dimension_semantics<parallel>], iteration_bounds = array<i64: 2, 1>, scalar_prefetch = 0 : i64, scratch_operands = 0 : i64, tpu.core_type = #tpu.core_type<tc>, window_params = [{transform_indices = @transform_0, window_bounds = array<i64: 1, 18, 16, 128>}, {pipeline_mode = #tpu.pipeline_mode<synchronous>, transform_indices = @transform_1, window_bounds = array<i64: 3, 128, 32>}, {pipeline_mode = #tpu.pipeline_mode<synchronous>, transform_indices = @transform_2, window_bounds = array<i64: 1, 32>}, {pipeline_mode = #tpu.pipeline_mode<synchronous>, transform_indices = @transform_3, window_bounds = array<i64: 32, 128>}, {pipeline_mode = #tpu.pipeline_mode<synchronous>, transform_indices = @transform_4, window_bounds = array<i64: 1, 128>}, {transform_indices = @transform_5, window_bounds = array<i64: 1, 256, 128>}]} {
    %c0 = arith.constant 0 : index
    %c0_0 = arith.constant 0 : index
    %c0_1 = arith.constant 0 : index
    %c0_2 = arith.constant 0 : index
    %0 = vector.load %arg2[%c0, %c0_0, %c0_1, %c0_2] : memref<1x18x16x128xbf16, #tpu.memory_space<vmem>>, vector<1x16x16x128xbf16>
    %1 = vector.shape_cast %0 : vector<1x16x16x128xbf16> to vector<16x16x128xbf16>
    %2 = vector.shape_cast %1 : vector<16x16x128xbf16> to vector<256x128xbf16>
    %c0_3 = arith.constant 0 : index
    %c0_4 = arith.constant 0 : index
    %c0_5 = arith.constant 0 : index
    %3 = vector.load %arg3[%c0_3, %c0_4, %c0_5] : memref<3x128x32xbf16, #tpu.memory_space<vmem>>, vector<1x128x32xbf16>
    %4 = vector.shape_cast %3 : vector<1x128x32xbf16> to vector<128x32xbf16>
    %cst = arith.constant dense<0.000000e+00> : vector<256x32xf32>
    %5 = tpu.matmul %2, %4, %cst {dimension_numbers = #tpu.dot_dimension_numbers<[1], [0], [0], [1], [0, 0, 1, 1], [], []>} : vector<256x128xbf16>, vector<128x32xbf16>, vector<256x32xf32> -> vector<256x32xf32>
    %c0_6 = arith.constant 0 : index
    %c1 = arith.constant 1 : index
    %c0_7 = arith.constant 0 : index
    %c0_8 = arith.constant 0 : index
    %6 = vector.load %arg2[%c0_6, %c1, %c0_7, %c0_8] : memref<1x18x16x128xbf16, #tpu.memory_space<vmem>>, vector<1x16x16x128xbf16>
    %7 = vector.shape_cast %6 : vector<1x16x16x128xbf16> to vector<16x16x128xbf16>
    %8 = vector.shape_cast %7 : vector<16x16x128xbf16> to vector<256x128xbf16>
    %c1_9 = arith.constant 1 : index
    %c0_10 = arith.constant 0 : index
    %c0_11 = arith.constant 0 : index
    %9 = vector.load %arg3[%c1_9, %c0_10, %c0_11] : memref<3x128x32xbf16, #tpu.memory_space<vmem>>, vector<1x128x32xbf16>
    %10 = vector.shape_cast %9 : vector<1x128x32xbf16> to vector<128x32xbf16>
    %cst_12 = arith.constant dense<0.000000e+00> : vector<256x32xf32>
    %11 = tpu.matmul %8, %10, %cst_12 {dimension_numbers = #tpu.dot_dimension_numbers<[1], [0], [0], [1], [0, 0, 1, 1], [], []>} : vector<256x128xbf16>, vector<128x32xbf16>, vector<256x32xf32> -> vector<256x32xf32>
    %12 = arith.addf %5, %11 : vector<256x32xf32>
    %c0_13 = arith.constant 0 : index
    %c2 = arith.constant 2 : index
    %c0_14 = arith.constant 0 : index
    %c0_15 = arith.constant 0 : index
    %13 = vector.load %arg2[%c0_13, %c2, %c0_14, %c0_15] : memref<1x18x16x128xbf16, #tpu.memory_space<vmem>>, vector<1x16x16x128xbf16>
    %14 = vector.shape_cast %13 : vector<1x16x16x128xbf16> to vector<16x16x128xbf16>
    %15 = vector.shape_cast %14 : vector<16x16x128xbf16> to vector<256x128xbf16>
    %c2_16 = arith.constant 2 : index
    %c0_17 = arith.constant 0 : index
    %c0_18 = arith.constant 0 : index
    %16 = vector.load %arg3[%c2_16, %c0_17, %c0_18] : memref<3x128x32xbf16, #tpu.memory_space<vmem>>, vector<1x128x32xbf16>
    %17 = vector.shape_cast %16 : vector<1x128x32xbf16> to vector<128x32xbf16>
    %cst_19 = arith.constant dense<0.000000e+00> : vector<256x32xf32>
    %18 = tpu.matmul %15, %17, %cst_19 {dimension_numbers = #tpu.dot_dimension_numbers<[1], [0], [0], [1], [0, 0, 1, 1], [], []>} : vector<256x128xbf16>, vector<128x32xbf16>, vector<256x32xf32> -> vector<256x32xf32>
    %19 = arith.addf %12, %18 : vector<256x32xf32>
    %c0_20 = arith.constant 0 : index
    %c0_21 = arith.constant 0 : index
    %20 = vector.load %arg4[%c0_20, %c0_21] : memref<1x32xf32, #tpu.memory_space<vmem>>, vector<1x32xf32>
    %21 = vector.broadcast %20 : vector<1x32xf32> to vector<256x32xf32>
    %22 = arith.addf %19, %21 : vector<256x32xf32>
    %cst_22 = arith.constant 0.000000e+00 : f32
    %23 = vector.broadcast %cst_22 : f32 to vector<256x32xf32>
    %24 = arith.maximumf %22, %23 : vector<256x32xf32>
    %25 = arith.truncf %24 : vector<256x32xf32> to vector<256x32xbf16>
    %c0_23 = arith.constant 0 : index
    %c0_24 = arith.constant 0 : index
    %26 = vector.load %arg5[%c0_23, %c0_24] : memref<32x128xbf16, #tpu.memory_space<vmem>>, vector<32x128xbf16>
    %cst_25 = arith.constant dense<0.000000e+00> : vector<256x128xf32>
    %27 = tpu.matmul %25, %26, %cst_25 {dimension_numbers = #tpu.dot_dimension_numbers<[1], [0], [0], [1], [0, 0, 1, 1], [], []>} : vector<256x32xbf16>, vector<32x128xbf16>, vector<256x128xf32> -> vector<256x128xf32>
    %c0_26 = arith.constant 0 : index
    %c0_27 = arith.constant 0 : index
    %28 = vector.load %arg6[%c0_26, %c0_27] : memref<1x128xf32, #tpu.memory_space<vmem>>, vector<1x128xf32>
    %29 = vector.broadcast %28 : vector<1x128xf32> to vector<256x128xf32>
    %30 = arith.addf %27, %29 : vector<256x128xf32>
    %31 = arith.truncf %30 : vector<256x128xf32> to vector<256x128xbf16>
    %c0_28 = arith.constant 0 : index
    %c0_29 = arith.constant 0 : index
    %c0_30 = arith.constant 0 : index
    %32 = vector.load %arg7[%c0_28, %c0_29, %c0_30] : memref<1x256x128xbf16, #tpu.memory_space<vmem>>, vector<1x256x128xbf16>
    %33 = vector.shape_cast %32 : vector<1x256x128xbf16> to vector<256x128xbf16>
    %34 = vector.shape_cast %31 : vector<256x128xbf16> to vector<1x256x128xbf16>
    tpu.vector_store %arg7[%c0_28, %c0_29, %c0_30], %34 {strides = array<i32>} : memref<1x256x128xbf16, #tpu.memory_space<vmem>>, vector<1x256x128xbf16>,
    return
  }
  func.func @transform_0(%arg0: i32, %arg1: i32) -> (i32, i32, i32, i32) {
    %c1_i32 = arith.constant 1 : i32
    %0 = arith.muli %arg0, %c1_i32 : i32
    %1 = arith.addi %0, %arg1 : i32
    %c0_i32 = arith.constant 0 : i32
    %c0_i32_0 = arith.constant 0 : i32
    %c0_i32_1 = arith.constant 0 : i32
    %c0_i32_2 = arith.constant 0 : i32
    return %1, %c0_i32, %c0_i32_0, %c0_i32_1 : i32, i32, i32, i32
  }
  func.func @transform_1(%arg0: i32, %arg1: i32) -> (i32, i32, i32) {
    %c0_i32 = arith.constant 0 : i32
    %c0_i32_0 = arith.constant 0 : i32
    %c0_i32_1 = arith.constant 0 : i32
    %c0_i32_2 = arith.constant 0 : i32
    return %c0_i32, %c0_i32_0, %c0_i32_1 : i32, i32, i32
  }
  func.func @transform_2(%arg0: i32, %arg1: i32) -> (i32, i32) {
    %c0_i32 = arith.constant 0 : i32
    %c0_i32_0 = arith.constant 0 : i32
    %c0_i32_1 = arith.constant 0 : i32
    return %c0_i32, %c0_i32_0 : i32, i32
  }
  func.func @transform_3(%arg0: i32, %arg1: i32) -> (i32, i32) {
    %c0_i32 = arith.constant 0 : i32
    %c0_i32_0 = arith.constant 0 : i32
    %c0_i32_1 = arith.constant 0 : i32
    return %c0_i32, %c0_i32_0 : i32, i32
  }
  func.func @transform_4(%arg0: i32, %arg1: i32) -> (i32, i32) {
    %c0_i32 = arith.constant 0 : i32
    %c0_i32_0 = arith.constant 0 : i32
    %c0_i32_1 = arith.constant 0 : i32
    return %c0_i32, %c0_i32_0 : i32, i32
  }
  func.func @transform_5(%arg0: i32, %arg1: i32) -> (i32, i32, i32) {
    %c0_i32 = arith.constant 0 : i32
    %c0_i32_0 = arith.constant 0 : i32
    return %arg0, %arg1, %c0_i32 : i32, i32, i32
  }
}

</mosaic_0001>

<llo_original>
// kernel: _core.1
$region0: #{_core.1}
  #allocation0 [shape = 'u32[]', space=smem, size = 0x4, offset = 0x4, fixed_abs, tag = 'smem constant byte address 0x4 - core index']
  #allocation1 [shape = 'u32[144,128]{1,0:T(1,128)}', space=vmem, size = 0x12000, scoped, tag = 'internal scratch']
  %s0 = inlined_call_operand.vmem [shape: bf16[2,18,16,128], index: 0, kind: input, shape index: {}]
  %s1 = inlined_call_operand.vmem [shape: bf16[3,128,32], index: 1, kind: input, shape index: {}]
  %s2 = inlined_call_operand.hbm [shape: f32[1,32], index: 2, kind: input, shape index: {}]
  %s3 = inlined_call_operand.vmem [shape: bf16[32,128], index: 3, kind: input, shape index: {}]
  %s4 = inlined_call_operand.hbm [shape: f32[1,128], index: 4, kind: input, shape index: {}]
  %s5 = inlined_call_operand.vmem [shape: bf16[2,256,128], index: 5, kind: output, shape index: {}]
  %s6 = sld [smem:[#allocation0]]
  $region61: #{_core.1} parent=0
    _
  %s8 = ssub.s32 1, %s6
  %s9 = scalar_select 0, %s8, %s6
  $region1: #{_core.1} parent=0
    #allocation2 [shape = 'u8[512]{0}', space=vmem, size = 0x400, scoped, tag = 'input window, operand 2, single buffered']
    #allocation3 [shape = 's32[2]{0}', space=sflag, size = 0x8, scoped, tag = 'scoped memory for _core.1']
    #allocation4 [shape = 'u8[512]{0}', space=vmem, size = 0x400, scoped, tag = 'input window, operand 4, single buffered']
    #allocation5 [shape = 's32[1]{0}', space=sflag, size = 0x4, scoped, tag = 'scoped memory for _core.1']
    %10 = vsyncpa [#allocation3], 0
    %11 = vsyncpa [#allocation5], 0
    loop: start=0, step=1, limit=4
    $region2: #{_core.1} parent=1 // loop_pre_header
      _
    $region3: #{_core.1} parent=1 // loop_header
      %s13 = sphi 0, %s17
      %p14 = scmp.ge.s32.totalorder %s13, 4
      %s20 = sphi 0, %s32
      %s21 = sphi 0, %s28
      %s22 = sphi 0, %s20
      %s23 = sphi 0, %s21
      %s24 = sphi 0, %s22
      %s25 = sphi 0, %s23
      %s37 = sphi 0, %s39
      %s40 = sphi 0, %s37
      %s41 = sphi 0, %s40
      %s57 = sphi 0, %s41
      %s61 = sphi 0, %s61
      %s63 = sphi 0, %s61
      %s64 = sphi 0, %s63
      %s78 = sphi 0, %s64
      %s82 = sphi 0, %s82
      %s84 = sphi 0, %s82
      %s85 = sphi 0, %s84
      %s99 = sphi 0, %s85
      %s103 = sphi 0, %s103
      %s105 = sphi 0, %s103
      %s106 = sphi 0, %s105
      %s120 = sphi 0, %s106
      %s124 = sphi 0, %s124
      %s126 = sphi 0, %s124
      %s127 = sphi 0, %s126
      %s141 = sphi 0, %s127
      %s149 = sphi 0, %s151
      %s152 = sphi 0, %s149
      %s153 = sphi 0, %s152
      %s169 = sphi 0, %s153
    $region4: #{_core.1} parent=1 // loop_header_branch
      %16 = sbr.rel (%p14) target = $region8
    $region5: #{_core.1} parent=1 // loop_body
      %s18 = ssub.s32 %s13, 1
      %s19 = ssub.s32 %s13, 2
      %s26 = sadd.s32 1, %s21
      %p27 = scmp.ge.s32.totalorder %s26, 1
      %s28 = scalar_select %p27, 0, %s26
      %s29 = sadd.s32 1, %s20
      %s30 = scalar_select %p27, %s29, %s20
      %p31 = scmp.ge.s32.totalorder %s30, 2
      %s32 = scalar_select %p31, 0, %s30
      %s33 = sadd.s32 %s20, %s21
      %s34 = sadd.s32 %s32, %s28
      %s35 = ssub.s32 %s33, %s34
      %p36 = scmp.eq.s32.totalorder %s35, 0
      %s38 = sadd.s32 %s37, 1
      %s39 = scalar_select %p36, %s37, %s38
      %p42 = pneg %p36
      %p43 = scmp.eq.s32.totalorder %s13, 1
      %p44 = por %p42, %p43
      %p45 = scmp.ne.s32.totalorder %s37, %s40
      %p46 = scmp.eq.s32.totalorder %s13, 0
      %p47 = por %p45, %p46
      %p48 = scmp.ne.s32.totalorder %s37, %s40
      %p49 = scmp.eq.s32.totalorder %s18, 1
      %p50 = por %p48, %p49
      %p51 = scmp.ne.s32.totalorder %s40, %s41
      %p52 = scmp.eq.s32.totalorder %s18, 0
      %p53 = por %p51, %p52
      %p54 = scmp.ne.s32.totalorder %s40, %s41
      %p55 = scmp.eq.s32.totalorder %s19, 1
      %p56 = por %p54, %p55
      %p58 = scmp.ne.s32.totalorder %s41, %s57
      %p59 = scmp.eq.s32.totalorder %s19, 0
      %p60 = por %p58, %p59
      %s62 = sadd.s32 %s61, 1
      %p65 = scmp.eq.s32.totalorder %s13, 1
      %p66 = scmp.ne.s32.totalorder %s61, %s63
      %p67 = scmp.eq.s32.totalorder %s13, 0
      %p68 = por %p66, %p67
      %p69 = scmp.ne.s32.totalorder %s61, %s63
      %p70 = scmp.eq.s32.totalorder %s18, 1
      %p71 = por %p69, %p70
      %p72 = scmp.ne.s32.totalorder %s63, %s64
      %p73 = scmp.eq.s32.totalorder %s18, 0
      %p74 = por %p72, %p73
      %p75 = scmp.ne.s32.totalorder %s63, %s64
      %p76 = scmp.eq.s32.totalorder %s19, 1
      %p77 = por %p75, %p76
      %p79 = scmp.ne.s32.totalorder %s64, %s78
      %p80 = scmp.eq.s32.totalorder %s19, 0
      %p81 = por %p79, %p80
      %s83 = sadd.s32 %s82, 1
      %p86 = scmp.eq.s32.totalorder %s13, 1
      %p87 = scmp.ne.s32.totalorder %s82, %s84
      %p88 = scmp.eq.s32.totalorder %s13, 0
      %p89 = por %p87, %p88
      %p90 = scmp.ne.s32.totalorder %s82, %s84
      %p91 = scmp.eq.s32.totalorder %s18, 1
      %p92 = por %p90, %p91
      %p93 = scmp.ne.s32.totalorder %s84, %s85
      %p94 = scmp.eq.s32.totalorder %s18, 0
      %p95 = por %p93, %p94
      %p96 = scmp.ne.s32.totalorder %s84, %s85
      %p97 = scmp.eq.s32.totalorder %s19, 1
      %p98 = por %p96, %p97
      %p100 = scmp.ne.s32.totalorder %s85, %s99
      %p101 = scmp.eq.s32.totalorder %s19, 0
      %p102 = por %p100, %p101
      %s104 = sadd.s32 %s103, 1
      %p107 = scmp.eq.s32.totalorder %s13, 1
      %p108 = scmp.ne.s32.totalorder %s103, %s105
      %p109 = scmp.eq.s32.totalorder %s13, 0
      %p110 = por %p108, %p109
      %p111 = scmp.ne.s32.totalorder %s103, %s105
      %p112 = scmp.eq.s32.totalorder %s18, 1
      %p113 = por %p111, %p112
      %p114 = scmp.ne.s32.totalorder %s105, %s106
      %p115 = scmp.eq.s32.totalorder %s18, 0
      %p116 = por %p114, %p115
      %p117 = scmp.ne.s32.totalorder %s105, %s106
      %p118 = scmp.eq.s32.totalorder %s19, 1
      %p119 = por %p117, %p118
      %p121 = scmp.ne.s32.totalorder %s106, %s120
      %p122 = scmp.eq.s32.totalorder %s19, 0
      %p123 = por %p121, %p122
      %s125 = sadd.s32 %s124, 1
      %p128 = scmp.eq.s32.totalorder %s13, 1
      %p129 = scmp.ne.s32.totalorder %s124, %s126
      %p130 = scmp.eq.s32.totalorder %s13, 0
      %p131 = por %p129, %p130
      %p132 = scmp.ne.s32.totalorder %s124, %s126
      %p133 = scmp.eq.s32.totalorder %s18, 1
      %p134 = por %p132, %p133
      %p135 = scmp.ne.s32.totalorder %s126, %s127
      %p136 = scmp.eq.s32.totalorder %s18, 0
      %p137 = por %p135, %p136
      %p138 = scmp.ne.s32.totalorder %s126, %s127
      %p139 = scmp.eq.s32.totalorder %s19, 1
      %p140 = por %p138, %p139
      %p142 = scmp.ne.s32.totalorder %s127, %s141
      %p143 = scmp.eq.s32.totalorder %s19, 0
      %p144 = por %p142, %p143
      %s145 = ssub.s32 %s20, %s32
      %s146 = ssub.s32 %s21, %s28
      %s147 = sor.u32 %s145, %s146
      %p148 = scmp.eq.s32.totalorder %s147, 0
      %s150 = sadd.s32 %s149, 1
      %s151 = scalar_select %p148, %s149, %s150
      %p154 = pneg %p148
      %p155 = scmp.eq.s32.totalorder %s13, 1
      %p156 = por %p154, %p155
      %p157 = scmp.ne.s32.totalorder %s149, %s152
      %p158 = scmp.eq.s32.totalorder %s13, 0
      %p159 = por %p157, %p158
      %p160 = scmp.ne.s32.totalorder %s149, %s152
      %p161 = scmp.eq.s32.totalorder %s18, 1
      %p162 = por %p160, %p161
      %p163 = scmp.ne.s32.totalorder %s152, %s153
      %p164 = scmp.eq.s32.totalorder %s18, 0
      %p165 = por %p163, %p164
      %p166 = scmp.ne.s32.totalorder %s152, %s153
      %p167 = scmp.eq.s32.totalorder %s19, 1
      %p168 = por %p166, %p167
      %p170 = scmp.ne.s32.totalorder %s153, %s169
      %p171 = scmp.eq.s32.totalorder %s19, 0
      %p172 = por %p170, %p171
      %p173 = scmp.le.s32.totalorder 1, %s13
      %p174 = scmp.lt.s32.totalorder %s13, 3
      %p175 = pnand %p173, %p174
      %p176 = pneg %p175
      // Predicated region
      $region9: #{_core.1} parent=5 // pred_check
        _
      $region10: #{_core.1} parent=5 // pred_check_branch
        %178 = sbr.rel (%p175) target = $region12
      $region11: #{_core.1} parent=5 // pred_region
        %s179 = ssub.s32 %s13, 1
        // Predicated region
        $region13: #{_core.1} parent=11 // pred_check
          %p180 = pneg %p74
        $region14: #{_core.1} parent=11 // pred_check_branch
          %182 = sbr.rel (%p180) target = $region16
        $region15: #{_core.1} parent=11 // pred_region
          _
        $region16: #{_core.1} parent=11 // pred_fallthru
          _
        // Predicated region
        $region17: #{_core.1} parent=11 // pred_check
          %p183 = pneg %p95
        $region18: #{_core.1} parent=11 // pred_check_branch
          %185 = sbr.rel (%p183) target = $region20
        $region19: #{_core.1} parent=11 // pred_region
          %s187 = ssub.s32 16, 16
          %188 = vsyncadd [#allocation3], %s187
          %s190 = sshll.u32 [#allocation2], 4
          %s191 = int_to_ptr.vmem [resolvable:$true] %s190
          %193 = dma.hbm_to_vmem [thread:$0]  %s2, 16, %s191, [#allocation3]
        $region20: #{_core.1} parent=11 // pred_fallthru
          _
        // Predicated region
        $region21: #{_core.1} parent=11 // pred_check
          %p194 = pneg %p116
        $region22: #{_core.1} parent=11 // pred_check_branch
          %196 = sbr.rel (%p194) target = $region24
        $region23: #{_core.1} parent=11 // pred_region
          _
        $region24: #{_core.1} parent=11 // pred_fallthru
          _
        // Predicated region
        $region25: #{_core.1} parent=11 // pred_check
          %p197 = pneg %p137
        $region26: #{_core.1} parent=11 // pred_check_branch
          %199 = sbr.rel (%p197) target = $region28
        $region27: #{_core.1} parent=11 // pred_region
          %s201 = ssub.s32 16, 16
          %202 = vsyncadd [#allocation5], %s201
          %s204 = sshll.u32 [#allocation4], 4
          %s205 = int_to_ptr.vmem [resolvable:$true] %s204
          %207 = dma.hbm_to_vmem [thread:$0]  %s4, 16, %s205, [#allocation5]
        $region28: #{_core.1} parent=11 // pred_fallthru
          _
      $region12: #{_core.1} parent=5 // pred_fallthru
        _
      %p208 = scmp.lt.s32.totalorder %s13, 2
      // Predicated region
      $region29: #{_core.1} parent=5 // pred_check
        %p209 = pneg %p208
      $region30: #{_core.1} parent=5 // pred_check_branch
        %211 = sbr.rel (%p209) target = $region32
      $region31: #{_core.1} parent=5 // pred_region
        // Predicated region
        $region33: #{_core.1} parent=31 // pred_check
          %p212 = pneg %p47
        $region34: #{_core.1} parent=31 // pred_check_branch
          %214 = sbr.rel (%p212) target = $region36
        $region35: #{_core.1} parent=31 // pred_region
          %s215 = sadd.s32 %s20, %s21
          %p216 = scmp.lt.s32.totalorder %s215, 1
          %s217 = scalar_select %p216, %s215, 1
          %s218 = smul.addr %s217, 36
          %s219 = smul.addr %s218, 4
          %s220 = scalar_lea.vmem %s0, %s219
          %s221 = sadd.s32 %s20, %s21
        $region36: #{_core.1} parent=31 // pred_fallthru
          _
      $region32: #{_core.1} parent=5 // pred_fallthru
        _
      %p222 = scmp.le.s32.totalorder 1, %s13
      %p223 = scmp.lt.s32.totalorder %s13, 3
      %p224 = pnand %p222, %p223
      %p225 = pneg %p224
      // Predicated region
      $region37: #{_core.1} parent=5 // pred_check
        _
      $region38: #{_core.1} parent=5 // pred_check_branch
        %227 = sbr.rel (%p224) target = $region40
      $region39: #{_core.1} parent=5 // pred_region
        %s228 = ssub.s32 %s13, 1
        // Predicated region
        $region41: #{_core.1} parent=39 // pred_check
          %p229 = pneg %p95
        $region42: #{_core.1} parent=39 // pred_check_branch
          %231 = sbr.rel (%p229) target = $region44
        $region43: #{_core.1} parent=39 // pred_region
          %232 = dma.done [#allocation3], 16
        $region44: #{_core.1} parent=39 // pred_fallthru
          _
        // Predicated region
        $region45: #{_core.1} parent=39 // pred_check
          %p233 = pneg %p137
        $region46: #{_core.1} parent=39 // pred_check_branch
          %235 = sbr.rel (%p233) target = $region48
        $region47: #{_core.1} parent=39 // pred_region
          %236 = dma.done [#allocation5], 16
        $region48: #{_core.1} parent=39 // pred_fallthru
          _
        %s237 = sadd.s32 %s22, %s23
        %p238 = scmp.lt.s32.totalorder %s237, 1
        %s239 = scalar_select %p238, %s237, 1
        %s240 = smul.addr %s239, 36
        %s241 = smul.addr %s240, 4
        %s242 = scalar_lea.vmem %s0, %s241
        %p243 = pneg %p53
        %p244 = pneg %p50
        %p245 = pneg %p74
        %p246 = pneg %p71
        %p247 = pneg %p95
        %p248 = pneg %p92
        %p249 = pneg %p116
        %p250 = pneg %p113
        %p251 = pneg %p137
        %p252 = pneg %p134
        %p253 = pneg %p165
        %p254 = pneg %p162
        %s255 = smul.u32 32, %s23
        %p256 = scmp.lt.s32.totalorder %s22, 1
        %s257 = scalar_select %p256, %s22, 1
        %p258 = scmp.lt.s32.totalorder %s255, 31
        %s259 = scalar_select %p258, %s255, 31
        %s260 = smul.addr %s257, 32
        %s261 = sadd.s32 %s259, %s260
        %s262 = smul.addr %s261, 4
        %s263 = scalar_lea.vmem %s5, %s262
        %s264 = sadd.s32 %s22, %s23
        %p265 = scmp.lt.s32.totalorder %s264, 1
        %s266 = scalar_select %p265, %s264, 1
        %s267 = smul.addr %s266, 36
        %s268 = smul.addr %s267, 4
        %s269 = scalar_lea.vmem %s0, %s268
        %s270 = sadd.s32 %s22, %s23
        %s271 = smul.u32 32, %s23
        %p272 = scmp.lt.s32.totalorder %s22, 1
        %s273 = scalar_select %p272, %s22, 1
        %p274 = scmp.lt.s32.totalorder %s271, 31
        %s275 = scalar_select %p274, %s271, 31
        %s276 = smul.addr %s273, 32
        %s277 = sadd.s32 %s275, %s276
        %s278 = smul.addr %s277, 4
        %s279 = scalar_lea.vmem %s5, %s278
        %s280 = smul.u32 32, %s23
        %v282 = vld [vmem:[%s269] sm:$0xf]
        %v283 = vld [vmem:[%s269 + $0x4] sm:$0xf]
        %v284 = vld [vmem:[%s269 + $0x8] sm:$0xf]
        %v285 = vld [vmem:[%s269 + $0xc] sm:$0xf]
        %v286 = vld [vmem:[%s269 + $0x10] sm:$0xf]
        %v287 = vld [vmem:[%s269 + $0x14] sm:$0xf]
        %v288 = vld [vmem:[%s269 + $0x18] sm:$0xf]
        %v289 = vld [vmem:[%s269 + $0x1c] sm:$0xf]
        %v290 = vld [vmem:[%s269 + $0x20] sm:$0xf]
        %v291 = vld [vmem:[%s269 + $0x24] sm:$0xf]
        %v292 = vld [vmem:[%s269 + $0x28] sm:$0xf]
        %v293 = vld [vmem:[%s269 + $0x2c] sm:$0xf]
        %v294 = vld [vmem:[%s269 + $0x30] sm:$0xf]
        %v295 = vld [vmem:[%s269 + $0x34] sm:$0xf]
        %v296 = vld [vmem:[%s269 + $0x38] sm:$0xf]
        %v297 = vld [vmem:[%s269 + $0x3c] sm:$0xf]
        %v298 = vld [vmem:[%s269 + $0x40] sm:$0xf]
        %v299 = vld [vmem:[%s269 + $0x44] sm:$0xf]
        %v300 = vld [vmem:[%s269 + $0x48] sm:$0xf]
        %v301 = vld [vmem:[%s269 + $0x4c] sm:$0xf]
        %v302 = vld [vmem:[%s269 + $0x50] sm:$0xf]
        %v303 = vld [vmem:[%s269 + $0x54] sm:$0xf]
        %v304 = vld [vmem:[%s269 + $0x58] sm:$0xf]
        %v305 = vld [vmem:[%s269 + $0x5c] sm:$0xf]
        %v306 = vld [vmem:[%s269 + $0x60] sm:$0xf]
        %v307 = vld [vmem:[%s269 + $0x64] sm:$0xf]
        %v308 = vld [vmem:[%s269 + $0x68] sm:$0xf]
        %v309 = vld [vmem:[%s269 + $0x6c] sm:$0xf]
        %v310 = vld [vmem:[%s269 + $0x70] sm:$0xf]
        %v311 = vld [vmem:[%s269 + $0x74] sm:$0xf]
        %v312 = vld [vmem:[%s269 + $0x78] sm:$0xf]
        %v313 = vld [vmem:[%s269 + $0x7c] sm:$0xf]
        %v314 = vld [vmem:[%s1] sm:$0xf]
        %v315 = vld [vmem:[%s1 + $0x4] sm:$0xf]
        %v316 = vld [vmem:[%s1 + $0x8] sm:$0xf]
        %v317 = vld [vmem:[%s1 + $0xc] sm:$0xf]
        %v318 = vld [vmem:[%s1 + $0x10] sm:$0xf]
        %v319 = vld [vmem:[%s1 + $0x14] sm:$0xf]
        %v320 = vld [vmem:[%s1 + $0x18] sm:$0xf]
        %v321 = vld [vmem:[%s1 + $0x1c] sm:$0xf]
        %v322 = vld [vmem:[%s1 + $0x20] sm:$0xf]
        %v323 = vld [vmem:[%s1 + $0x24] sm:$0xf]
        %v324 = vld [vmem:[%s1 + $0x28] sm:$0xf]
        %v325 = vld [vmem:[%s1 + $0x2c] sm:$0xf]
        %v326 = vld [vmem:[%s1 + $0x30] sm:$0xf]
        %v327 = vld [vmem:[%s1 + $0x34] sm:$0xf]
        %v328 = vld [vmem:[%s1 + $0x38] sm:$0xf]
        %v329 = vld [vmem:[%s1 + $0x3c] sm:$0xf]
        %s330 = scalar_lea.vmem %s269, 8
        %v331 = vld [vmem:[%s330] sm:$0xf]
        %v332 = vld [vmem:[%s330 + $0x4] sm:$0xf]
        %v333 = vld [vmem:[%s330 + $0x8] sm:$0xf]
        %v334 = vld [vmem:[%s330 + $0xc] sm:$0xf]
        %v335 = vld [vmem:[%s330 + $0x10] sm:$0xf]
        %v336 = vld [vmem:[%s330 + $0x14] sm:$0xf]
        %v337 = vld [vmem:[%s330 + $0x18] sm:$0xf]
        %v338 = vld [vmem:[%s330 + $0x1c] sm:$0xf]
        %v339 = vld [vmem:[%s330 + $0x20] sm:$0xf]
        %v340 = vld [vmem:[%s330 + $0x24] sm:$0xf]
        %v341 = vld [vmem:[%s330 + $0x28] sm:$0xf]
        %v342 = vld [vmem:[%s330 + $0x2c] sm:$0xf]
        %v343 = vld [vmem:[%s330 + $0x30] sm:$0xf]
        %v344 = vld [vmem:[%s330 + $0x34] sm:$0xf]
        %v345 = vld [vmem:[%s330 + $0x38] sm:$0xf]
        %v346 = vld [vmem:[%s330 + $0x3c] sm:$0xf]
        %v347 = vld [vmem:[%s330 + $0x40] sm:$0xf]
        %v348 = vld [vmem:[%s330 + $0x44] sm:$0xf]
        %v349 = vld [vmem:[%s330 + $0x48] sm:$0xf]
        %v350 = vld [vmem:[%s330 + $0x4c] sm:$0xf]
        %v351 = vld [vmem:[%s330 + $0x50] sm:$0xf]
        %v352 = vld [vmem:[%s330 + $0x54] sm:$0xf]
        %v353 = vld [vmem:[%s330 + $0x58] sm:$0xf]
        %v354 = vld [vmem:[%s330 + $0x5c] sm:$0xf]
        %v355 = vld [vmem:[%s330 + $0x60] sm:$0xf]
        %v356 = vld [vmem:[%s330 + $0x64] sm:$0xf]
        %v357 = vld [vmem:[%s330 + $0x68] sm:$0xf]
        %v358 = vld [vmem:[%s330 + $0x6c] sm:$0xf]
        %v359 = vld [vmem:[%s330 + $0x70] sm:$0xf]
        %v360 = vld [vmem:[%s330 + $0x74] sm:$0xf]
        %v361 = vld [vmem:[%s330 + $0x78] sm:$0xf]
        %v362 = vld [vmem:[%s330 + $0x7c] sm:$0xf]
        %s363 = scalar_lea.vmem %s1, 64
        %v364 = vld [vmem:[%s363] sm:$0xf]
        %v365 = vld [vmem:[%s363 + $0x4] sm:$0xf]
        %v366 = vld [vmem:[%s363 + $0x8] sm:$0xf]
        %v367 = vld [vmem:[%s363 + $0xc] sm:$0xf]
        %v368 = vld [vmem:[%s363 + $0x10] sm:$0xf]
        %v369 = vld [vmem:[%s363 + $0x14] sm:$0xf]
        %v370 = vld [vmem:[%s363 + $0x18] sm:$0xf]
        %v371 = vld [vmem:[%s363 + $0x1c] sm:$0xf]
        %v372 = vld [vmem:[%s363 + $0x20] sm:$0xf]
        %v373 = vld [vmem:[%s363 + $0x24] sm:$0xf]
        %v374 = vld [vmem:[%s363 + $0x28] sm:$0xf]
        %v375 = vld [vmem:[%s363 + $0x2c] sm:$0xf]
        %v376 = vld [vmem:[%s363 + $0x30] sm:$0xf]
        %v377 = vld [vmem:[%s363 + $0x34] sm:$0xf]
        %v378 = vld [vmem:[%s363 + $0x38] sm:$0xf]
        %v379 = vld [vmem:[%s363 + $0x3c] sm:$0xf]
        %v412 = vunpack.c.l.b16 %v331
        %v413 = vunpack.c.l.b16 %v332
        %v414 = vunpack.c.l.b16 %v333
        %v415 = vunpack.c.l.b16 %v334
        %v416 = vunpack.c.l.b16 %v335
        %v417 = vunpack.c.l.b16 %v336
        %v418 = vunpack.c.l.b16 %v337
        %v419 = vunpack.c.l.b16 %v338
        %v420 = vunpack.c.l.b16 %v339
        %v421 = vunpack.c.l.b16 %v340
        %v422 = vunpack.c.l.b16 %v341
        %v423 = vunpack.c.l.b16 %v342
        %v424 = vunpack.c.l.b16 %v343
        %v425 = vunpack.c.l.b16 %v344
        %v426 = vunpack.c.l.b16 %v345
        %v427 = vunpack.c.l.b16 %v346
        %v428 = vunpack.c.l.b16 %v347
        %v429 = vunpack.c.l.b16 %v348
        %v430 = vunpack.c.l.b16 %v349
        %v431 = vunpack.c.l.b16 %v350
        %v432 = vunpack.c.l.b16 %v351
        %v433 = vunpack.c.l.b16 %v352
        %v434 = vunpack.c.l.b16 %v353
        %v435 = vunpack.c.l.b16 %v354
        %v436 = vunpack.c.l.b16 %v355
        %v437 = vunpack.c.l.b16 %v356
        %v438 = vunpack.c.l.b16 %v357
        %v439 = vunpack.c.l.b16 %v358
        %v440 = vunpack.c.l.b16 %v359
        %v441 = vunpack.c.l.b16 %v360
        %v442 = vunpack.c.l.b16 %v361
        %v443 = vunpack.c.l.b16 %v362
        %v444 = vpack.c.b16 %v413, %v412
        %v445 = vpack.c.b16 %v415, %v414
        %v446 = vpack.c.b16 %v417, %v416
        %v447 = vpack.c.b16 %v419, %v418
        %v448 = vpack.c.b16 %v421, %v420
        %v449 = vpack.c.b16 %v423, %v422
        %v450 = vpack.c.b16 %v425, %v424
        %v451 = vpack.c.b16 %v427, %v426
        %v452 = vpack.c.b16 %v429, %v428
        %v453 = vpack.c.b16 %v431, %v430
        %v454 = vpack.c.b16 %v433, %v432
        %v455 = vpack.c.b16 %v435, %v434
        %v456 = vpack.c.b16 %v437, %v436
        %v457 = vpack.c.b16 %v439, %v438
        %v458 = vpack.c.b16 %v441, %v440
        %v459 = vpack.c.b16 %v443, %v442
        %v492 = vunpack.c.l.b16 %v364
        %v493 = vunpack.c.l.b16 %v365
        %v494 = vunpack.c.l.b16 %v366
        %v495 = vunpack.c.l.b16 %v367
        %v496 = vunpack.c.l.b16 %v368
        %v497 = vunpack.c.l.b16 %v369
        %v498 = vunpack.c.l.b16 %v370
        %v499 = vunpack.c.l.b16 %v371
        %v500 = vunpack.c.l.b16 %v372
        %v501 = vunpack.c.l.b16 %v373
        %v502 = vunpack.c.l.b16 %v374
        %v503 = vunpack.c.l.b16 %v375
        %v504 = vunpack.c.l.b16 %v376
        %v505 = vunpack.c.l.b16 %v377
        %v506 = vunpack.c.l.b16 %v378
        %v507 = vunpack.c.l.b16 %v379
        %v508 = vpack.c.b16 %v493, %v492
        %v509 = vpack.c.b16 %v495, %v494
        %v510 = vpack.c.b16 %v497, %v496
        %v511 = vpack.c.b16 %v499, %v498
        %v512 = vpack.c.b16 %v501, %v500
        %v513 = vpack.c.b16 %v503, %v502
        %v514 = vpack.c.b16 %v505, %v504
        %v515 = vpack.c.b16 %v507, %v506
        %524 = vmatprep.subr.bf16.mxu0 0
        %525 = vmatpush1.bf16.msra.mxu0 %v508
        %526 = vmatprep.subr.bf16.mxu0 0
        %527 = vmatpush1.bf16.msra.mxu0 %v509
        %528 = vmatprep.subr.bf16.mxu0 0
        %529 = vmatpush1.bf16.msra.mxu0 %v510
        %530 = vmatprep.subr.bf16.mxu0 0
        %531 = vmatpush1.bf16.msra.mxu0 %v511
        %532 = vmatprep.subr.bf16.mxu0 0
        %533 = vmatpush1.bf16.msra.mxu0 %v512
        %534 = vmatprep.subr.bf16.mxu0 0
        %535 = vmatpush1.bf16.msra.mxu0 %v513
        %536 = vmatprep.subr.bf16.mxu0 0
        %537 = vmatpush1.bf16.msra.mxu0 %v514
        %538 = vmatprep.subr.bf16.mxu0 0
        %539 = vmatpush1.bf16.msra.mxu0 %v515
        %540 = vmatprep.subr.bf16.mxu0 0
        %541 = vmatpush1.bf16.msra.mxu0 0
        %542 = vmatprep.subr.bf16.mxu0 0
        %543 = vmatpush1.bf16.msra.mxu0 0
        %544 = vmatprep.subr.bf16.mxu0 0
        %545 = vmatpush1.bf16.msra.mxu0 0
        %546 = vmatprep.subr.bf16.mxu0 0
        %547 = vmatpush1.bf16.msra.mxu0 0
        %548 = vmatprep.subr.bf16.mxu0 0
        %549 = vmatpush1.bf16.msra.mxu0 0
        %550 = vmatprep.subr.bf16.mxu0 0
        %551 = vmatpush1.bf16.msra.mxu0 0
        %552 = vmatprep.subr.bf16.mxu0 0
        %553 = vmatpush1.bf16.msra.mxu0 0
        %554 = vmatprep.subr.bf16.mxu0 0
        %555 = vmatpush1.bf16.msra.mxu0 0
        %556 = vmatprep.mubr.bf16.mxu0 0
        %557 = vmatmul.mubr.bf16.gmra.mrb[0].mxu0 %v444
        %v558 = vpop.f32.mrb[0].mxu0
        %v559 = vadd.f32 0.0, %v558
        %v560 = vpop.f32.mrb[0].mxu0
        %v561 = vpop.f32.mrb[0].mxu0
        %v562 = vadd.f32 0.0, %v561
        %v563 = vpop.f32.mrb[0].mxu0
        %564 = vmatprep.mubr.bf16.mxu0 0
        %565 = vmatmul.mubr.bf16.gmra.mrb[0].mxu0 %v445
        %v566 = vpop.f32.mrb[0].mxu0
        %v567 = vadd.f32 0.0, %v566
        %v568 = vpop.f32.mrb[0].mxu0
        %v569 = vpop.f32.mrb[0].mxu0
        %v570 = vadd.f32 0.0, %v569
        %v571 = vpop.f32.mrb[0].mxu0
        %572 = vmatprep.mubr.bf16.mxu0 0
        %573 = vmatmul.mubr.bf16.gmra.mrb[0].mxu0 %v446
        %v574 = vpop.f32.mrb[0].mxu0
        %v575 = vadd.f32 0.0, %v574
        %v576 = vpop.f32.mrb[0].mxu0
        %v577 = vpop.f32.mrb[0].mxu0
        %v578 = vadd.f32 0.0, %v577
        %v579 = vpop.f32.mrb[0].mxu0
        %580 = vmatprep.mubr.bf16.mxu0 0
        %581 = vmatmul.mubr.bf16.gmra.mrb[0].mxu0 %v447
        %v582 = vpop.f32.mrb[0].mxu0
        %v583 = vadd.f32 0.0, %v582
        %v584 = vpop.f32.mrb[0].mxu0
        %v585 = vpop.f32.mrb[0].mxu0
        %v586 = vadd.f32 0.0, %v585
        %v587 = vpop.f32.mrb[0].mxu0
        %588 = vmatprep.mubr.bf16.mxu0 0
        %589 = vmatmul.mubr.bf16.gmra.mrb[0].mxu0 %v448
        %v590 = vpop.f32.mrb[0].mxu0
        %v591 = vadd.f32 0.0, %v590
        %v592 = vpop.f32.mrb[0].mxu0
        %v593 = vpop.f32.mrb[0].mxu0
        %v594 = vadd.f32 0.0, %v593
        %v595 = vpop.f32.mrb[0].mxu0
        %596 = vmatprep.mubr.bf16.mxu0 0
        %597 = vmatmul.mubr.bf16.gmra.mrb[0].mxu0 %v449
        %v598 = vpop.f32.mrb[0].mxu0
        %v599 = vadd.f32 0.0, %v598
        %v600 = vpop.f32.mrb[0].mxu0
        %v601 = vpop.f32.mrb[0].mxu0
        %v602 = vadd.f32 0.0, %v601
        %v603 = vpop.f32.mrb[0].mxu0
        %604 = vmatprep.mubr.bf16.mxu0 0
        %605 = vmatmul.mubr.bf16.gmra.mrb[0].mxu0 %v450
        %v606 = vpop.f32.mrb[0].mxu0
        %v607 = vadd.f32 0.0, %v606
        %v608 = vpop.f32.mrb[0].mxu0
        %v609 = vpop.f32.mrb[0].mxu0
        %v610 = vadd.f32 0.0, %v609
        %v611 = vpop.f32.mrb[0].mxu0
        %612 = vmatprep.mubr.bf16.mxu0 0
        %613 = vmatmul.mubr.bf16.gmra.mrb[0].mxu0 %v451
        %v614 = vpop.f32.mrb[0].mxu0
        %v615 = vadd.f32 0.0, %v614
        %v616 = vpop.f32.mrb[0].mxu0
        %v617 = vpop.f32.mrb[0].mxu0
        %v618 = vadd.f32 0.0, %v617
        %v619 = vpop.f32.mrb[0].mxu0
        %620 = vmatprep.mubr.bf16.mxu0 0
        %621 = vmatmul.mubr.bf16.gmra.mrb[0].mxu0 %v452
        %v622 = vpop.f32.mrb[0].mxu0
        %v623 = vadd.f32 0.0, %v622
        %v624 = vpop.f32.mrb[0].mxu0
        %v625 = vpop.f32.mrb[0].mxu0
        %v626 = vadd.f32 0.0, %v625
        %v627 = vpop.f32.mrb[0].mxu0
        %628 = vmatprep.mubr.bf16.mxu0 0
        %629 = vmatmul.mubr.bf16.gmra.mrb[0].mxu0 %v453
        %v630 = vpop.f32.mrb[0].mxu0
        %v631 = vadd.f32 0.0, %v630
        %v632 = vpop.f32.mrb[0].mxu0
        %v633 = vpop.f32.mrb[0].mxu0
        %v634 = vadd.f32 0.0, %v633
        %v635 = vpop.f32.mrb[0].mxu0
        %636 = vmatprep.mubr.bf16.mxu0 0
        %637 = vmatmul.mubr.bf16.gmra.mrb[0].mxu0 %v454
        %v638 = vpop.f32.mrb[0].mxu0
        %v639 = vadd.f32 0.0, %v638
        %v640 = vpop.f32.mrb[0].mxu0
        %v641 = vpop.f32.mrb[0].mxu0
        %v642 = vadd.f32 0.0, %v641
        %v643 = vpop.f32.mrb[0].mxu0
        %644 = vmatprep.mubr.bf16.mxu0 0
        %645 = vmatmul.mubr.bf16.gmra.mrb[0].mxu0 %v455
        %v646 = vpop.f32.mrb[0].mxu0
        %v647 = vadd.f32 0.0, %v646
        %v648 = vpop.f32.mrb[0].mxu0
        %v649 = vpop.f32.mrb[0].mxu0
        %v650 = vadd.f32 0.0, %v649
        %v651 = vpop.f32.mrb[0].mxu0
        %652 = vmatprep.mubr.bf16.mxu0 0
        %653 = vmatmul.mubr.bf16.gmra.mrb[0].mxu0 %v456
        %v654 = vpop.f32.mrb[0].mxu0
        %v655 = vadd.f32 0.0, %v654
        %v656 = vpop.f32.mrb[0].mxu0
        %v657 = vpop.f32.mrb[0].mxu0
        %v658 = vadd.f32 0.0, %v657
        %v659 = vpop.f32.mrb[0].mxu0
        %660 = vmatprep.mubr.bf16.mxu0 0
        %661 = vmatmul.mubr.bf16.gmra.mrb[0].mxu0 %v457
        %v662 = vpop.f32.mrb[0].mxu0
        %v663 = vadd.f32 0.0, %v662
        %v664 = vpop.f32.mrb[0].mxu0
        %v665 = vpop.f32.mrb[0].mxu0
        %v666 = vadd.f32 0.0, %v665
        %v667 = vpop.f32.mrb[0].mxu0
        %668 = vmatprep.mubr.bf16.mxu0 0
        %669 = vmatmul.mubr.bf16.gmra.mrb[0].mxu0 %v458
        %v670 = vpop.f32.mrb[0].mxu0
        %v671 = vadd.f32 0.0, %v670
        %v672 = vpop.f32.mrb[0].mxu0
        %v673 = vpop.f32.mrb[0].mxu0
        %v674 = vadd.f32 0.0, %v673
        %v675 = vpop.f32.mrb[0].mxu0
        %676 = vmatprep.mubr.bf16.mxu0 0
        %677 = vmatmul.mubr.bf16.gmra.mrb[0].mxu0 %v459
        %v678 = vpop.f32.mrb[0].mxu0
        %v679 = vadd.f32 0.0, %v678
        %v680 = vpop.f32.mrb[0].mxu0
        %v681 = vpop.f32.mrb[0].mxu0
        %v682 = vadd.f32 0.0, %v681
        %v683 = vpop.f32.mrb[0].mxu0
        %684 = vdwg.mxu0
        %v717 = vunpack.c.l.b16 %v282
        %v718 = vunpack.c.l.b16 %v283
        %v719 = vunpack.c.l.b16 %v284
        %v720 = vunpack.c.l.b16 %v285
        %v721 = vunpack.c.l.b16 %v286
        %v722 = vunpack.c.l.b16 %v287
        %v723 = vunpack.c.l.b16 %v288
        %v724 = vunpack.c.l.b16 %v289
        %v725 = vunpack.c.l.b16 %v290
        %v726 = vunpack.c.l.b16 %v291
        %v727 = vunpack.c.l.b16 %v292
        %v728 = vunpack.c.l.b16 %v293
        %v729 = vunpack.c.l.b16 %v294
        %v730 = vunpack.c.l.b16 %v295
        %v731 = vunpack.c.l.b16 %v296
        %v732 = vunpack.c.l.b16 %v297
        %v733 = vunpack.c.l.b16 %v298
        %v734 = vunpack.c.l.b16 %v299
        %v735 = vunpack.c.l.b16 %v300
        %v736 = vunpack.c.l.b16 %v301
        %v737 = vunpack.c.l.b16 %v302
        %v738 = vunpack.c.l.b16 %v303
        %v739 = vunpack.c.l.b16 %v304
        %v740 = vunpack.c.l.b16 %v305
        %v741 = vunpack.c.l.b16 %v306
        %v742 = vunpack.c.l.b16 %v307
        %v743 = vunpack.c.l.b16 %v308
        %v744 = vunpack.c.l.b16 %v309
        %v745 = vunpack.c.l.b16 %v310
        %v746 = vunpack.c.l.b16 %v311
        %v747 = vunpack.c.l.b16 %v312
        %v748 = vunpack.c.l.b16 %v313
        %v749 = vpack.c.b16 %v718, %v717
        %v750 = vpack.c.b16 %v720, %v719
        %v751 = vpack.c.b16 %v722, %v721
        %v752 = vpack.c.b16 %v724, %v723
        %v753 = vpack.c.b16 %v726, %v725
        %v754 = vpack.c.b16 %v728, %v727
        %v755 = vpack.c.b16 %v730, %v729
        %v756 = vpack.c.b16 %v732, %v731
        %v757 = vpack.c.b16 %v734, %v733
        %v758 = vpack.c.b16 %v736, %v735
        %v759 = vpack.c.b16 %v738, %v737
        %v760 = vpack.c.b16 %v740, %v739
        %v761 = vpack.c.b16 %v742, %v741
        %v762 = vpack.c.b16 %v744, %v743
        %v763 = vpack.c.b16 %v746, %v745
        %v764 = vpack.c.b16 %v748, %v747
        %v797 = vunpack.c.l.b16 %v314
        %v798 = vunpack.c.l.b16 %v315
        %v799 = vunpack.c.l.b16 %v316
        %v800 = vunpack.c.l.b16 %v317
        %v801 = vunpack.c.l.b16 %v318
        %v802 = vunpack.c.l.b16 %v319
        %v803 = vunpack.c.l.b16 %v320
        %v804 = vunpack.c.l.b16 %v321
        %v805 = vunpack.c.l.b16 %v322
        %v806 = vunpack.c.l.b16 %v323
        %v807 = vunpack.c.l.b16 %v324
        %v808 = vunpack.c.l.b16 %v325
        %v809 = vunpack.c.l.b16 %v326
        %v810 = vunpack.c.l.b16 %v327
        %v811 = vunpack.c.l.b16 %v328
        %v812 = vunpack.c.l.b16 %v329
        %v813 = vpack.c.b16 %v798, %v797
        %v814 = vpack.c.b16 %v800, %v799
        %v815 = vpack.c.b16 %v802, %v801
        %v816 = vpack.c.b16 %v804, %v803
        %v817 = vpack.c.b16 %v806, %v805
        %v818 = vpack.c.b16 %v808, %v807
        %v819 = vpack.c.b16 %v810, %v809
        %v820 = vpack.c.b16 %v812, %v811
        %829 = vmatprep.subr.bf16.mxu0 0
        %830 = vmatpush1.bf16.msra.mxu0 %v813
        %831 = vmatprep.subr.bf16.mxu0 0
        %832 = vmatpush1.bf16.msra.mxu0 %v814
        %833 = vmatprep.subr.bf16.mxu0 0
        %834 = vmatpush1.bf16.msra.mxu0 %v815
        %835 = vmatprep.subr.bf16.mxu0 0
        %836 = vmatpush1.bf16.msra.mxu0 %v816
        %837 = vmatprep.subr.bf16.mxu0 0
        %838 = vmatpush1.bf16.msra.mxu0 %v817
        %839 = vmatprep.subr.bf16.mxu0 0
        %840 = vmatpush1.bf16.msra.mxu0 %v818
        %841 = vmatprep.subr.bf16.mxu0 0
        %842 = vmatpush1.bf16.msra.mxu0 %v819
        %843 = vmatprep.subr.bf16.mxu0 0
        %844 = vmatpush1.bf16.msra.mxu0 %v820
        %845 = vmatprep.subr.bf16.mxu0 0
        %846 = vmatpush1.bf16.msra.mxu0 0
        %847 = vmatprep.subr.bf16.mxu0 0
        %848 = vmatpush1.bf16.msra.mxu0 0
        %849 = vmatprep.subr.bf16.mxu0 0
        %850 = vmatpush1.bf16.msra.mxu0 0
        %851 = vmatprep.subr.bf16.mxu0 0
        %852 = vmatpush1.bf16.msra.mxu0 0
        %853 = vmatprep.subr.bf16.mxu0 0
        %854 = vmatpush1.bf16.msra.mxu0 0
        %855 = vmatprep.subr.bf16.mxu0 0
        %856 = vmatpush1.bf16.msra.mxu0 0
        %857 = vmatprep.subr.bf16.mxu0 0
        %858 = vmatpush1.bf16.msra.mxu0 0
        %859 = vmatprep.subr.bf16.mxu0 0
        %860 = vmatpush1.bf16.msra.mxu0 0
        %861 = vmatprep.mubr.bf16.mxu0 0
        %862 = vmatmul.mubr.bf16.gmra.mrb[0].mxu0 %v749
        %v863 = vpop.f32.mrb[0].mxu0
        %v864 = vadd.f32 %v559, %v863
        %v865 = vpop.f32.mrb[0].mxu0
        %v866 = vpop.f32.mrb[0].mxu0
        %v867 = vadd.f32 %v562, %v866
        %v868 = vpop.f32.mrb[0].mxu0
        %869 = vmatprep.mubr.bf16.mxu0 0
        %870 = vmatmul.mubr.bf16.gmra.mrb[0].mxu0 %v750
        %v871 = vpop.f32.mrb[0].mxu0
        %v872 = vadd.f32 %v567, %v871
        %v873 = vpop.f32.mrb[0].mxu0
        %v874 = vpop.f32.mrb[0].mxu0
        %v875 = vadd.f32 %v570, %v874
        %v876 = vpop.f32.mrb[0].mxu0
        %877 = vmatprep.mubr.bf16.mxu0 0
        %878 = vmatmul.mubr.bf16.gmra.mrb[0].mxu0 %v751
        %v879 = vpop.f32.mrb[0].mxu0
        %v880 = vadd.f32 %v575, %v879
        %v881 = vpop.f32.mrb[0].mxu0
        %v882 = vpop.f32.mrb[0].mxu0
        %v883 = vadd.f32 %v578, %v882
        %v884 = vpop.f32.mrb[0].mxu0
        %885 = vmatprep.mubr.bf16.mxu0 0
        %886 = vmatmul.mubr.bf16.gmra.mrb[0].mxu0 %v752
        %v887 = vpop.f32.mrb[0].mxu0
        %v888 = vadd.f32 %v583, %v887
        %v889 = vpop.f32.mrb[0].mxu0
        %v890 = vpop.f32.mrb[0].mxu0
        %v891 = vadd.f32 %v586, %v890
        %v892 = vpop.f32.mrb[0].mxu0
        %893 = vmatprep.mubr.bf16.mxu0 0
        %894 = vmatmul.mubr.bf16.gmra.mrb[0].mxu0 %v753
        %v895 = vpop.f32.mrb[0].mxu0
        %v896 = vadd.f32 %v591, %v895
        %v897 = vpop.f32.mrb[0].mxu0
        %v898 = vpop.f32.mrb[0].mxu0
        %v899 = vadd.f32 %v594, %v898
        %v900 = vpop.f32.mrb[0].mxu0
        %901 = vmatprep.mubr.bf16.mxu0 0
        %902 = vmatmul.mubr.bf16.gmra.mrb[0].mxu0 %v754
        %v903 = vpop.f32.mrb[0].mxu0
        %v904 = vadd.f32 %v599, %v903
        %v905 = vpop.f32.mrb[0].mxu0
        %v906 = vpop.f32.mrb[0].mxu0
        %v907 = vadd.f32 %v602, %v906
        %v908 = vpop.f32.mrb[0].mxu0
        %909 = vmatprep.mubr.bf16.mxu0 0
        %910 = vmatmul.mubr.bf16.gmra.mrb[0].mxu0 %v755
        %v911 = vpop.f32.mrb[0].mxu0
        %v912 = vadd.f32 %v607, %v911
        %v913 = vpop.f32.mrb[0].mxu0
        %v914 = vpop.f32.mrb[0].mxu0
        %v915 = vadd.f32 %v610, %v914
        %v916 = vpop.f32.mrb[0].mxu0
        %917 = vmatprep.mubr.bf16.mxu0 0
        %918 = vmatmul.mubr.bf16.gmra.mrb[0].mxu0 %v756
        %v919 = vpop.f32.mrb[0].mxu0
        %v920 = vadd.f32 %v615, %v919
        %v921 = vpop.f32.mrb[0].mxu0
        %v922 = vpop.f32.mrb[0].mxu0
        %v923 = vadd.f32 %v618, %v922
        %v924 = vpop.f32.mrb[0].mxu0
        %925 = vmatprep.mubr.bf16.mxu0 0
        %926 = vmatmul.mubr.bf16.gmra.mrb[0].mxu0 %v757
        %v927 = vpop.f32.mrb[0].mxu0
        %v928 = vadd.f32 %v623, %v927
        %v929 = vpop.f32.mrb[0].mxu0
        %v930 = vpop.f32.mrb[0].mxu0
        %v931 = vadd.f32 %v626, %v930
        %v932 = vpop.f32.mrb[0].mxu0
        %933 = vmatprep.mubr.bf16.mxu0 0
        %934 = vmatmul.mubr.bf16.gmra.mrb[0].mxu0 %v758
        %v935 = vpop.f32.mrb[0].mxu0
        %v936 = vadd.f32 %v631, %v935
        %v937 = vpop.f32.mrb[0].mxu0
        %v938 = vpop.f32.mrb[0].mxu0
        %v939 = vadd.f32 %v634, %v938
        %v940 = vpop.f32.mrb[0].mxu0
        %941 = vmatprep.mubr.bf16.mxu0 0
        %942 = vmatmul.mubr.bf16.gmra.mrb[0].mxu0 %v759
        %v943 = vpop.f32.mrb[0].mxu0
        %v944 = vadd.f32 %v639, %v943
        %v945 = vpop.f32.mrb[0].mxu0
        %v946 = vpop.f32.mrb[0].mxu0
        %v947 = vadd.f32 %v642, %v946
        %v948 = vpop.f32.mrb[0].mxu0
        %949 = vmatprep.mubr.bf16.mxu0 0
        %950 = vmatmul.mubr.bf16.gmra.mrb[0].mxu0 %v760
        %v951 = vpop.f32.mrb[0].mxu0
        %v952 = vadd.f32 %v647, %v951
        %v953 = vpop.f32.mrb[0].mxu0
        %v954 = vpop.f32.mrb[0].mxu0
        %v955 = vadd.f32 %v650, %v954
        %v956 = vpop.f32.mrb[0].mxu0
        %957 = vmatprep.mubr.bf16.mxu0 0
        %958 = vmatmul.mubr.bf16.gmra.mrb[0].mxu0 %v761
        %v959 = vpop.f32.mrb[0].mxu0
        %v960 = vadd.f32 %v655, %v959
        %v961 = vpop.f32.mrb[0].mxu0
        %v962 = vpop.f32.mrb[0].mxu0
        %v963 = vadd.f32 %v658, %v962
        %v964 = vpop.f32.mrb[0].mxu0
        %965 = vmatprep.mubr.bf16.mxu0 0
        %966 = vmatmul.mubr.bf16.gmra.mrb[0].mxu0 %v762
        %v967 = vpop.f32.mrb[0].mxu0
        %v968 = vadd.f32 %v663, %v967
        %v969 = vpop.f32.mrb[0].mxu0
        %v970 = vpop.f32.mrb[0].mxu0
        %v971 = vadd.f32 %v666, %v970
        %v972 = vpop.f32.mrb[0].mxu0
        %973 = vmatprep.mubr.bf16.mxu0 0
        %974 = vmatmul.mubr.bf16.gmra.mrb[0].mxu0 %v763
        %v975 = vpop.f32.mrb[0].mxu0
        %v976 = vadd.f32 %v671, %v975
        %v977 = vpop.f32.mrb[0].mxu0
        %v978 = vpop.f32.mrb[0].mxu0
        %v979 = vadd.f32 %v674, %v978
        %v980 = vpop.f32.mrb[0].mxu0
        %981 = vmatprep.mubr.bf16.mxu0 0
        %982 = vmatmul.mubr.bf16.gmra.mrb[0].mxu0 %v764
        %v983 = vpop.f32.mrb[0].mxu0
        %v984 = vadd.f32 %v679, %v983
        %v985 = vpop.f32.mrb[0].mxu0
        %v986 = vpop.f32.mrb[0].mxu0
        %v987 = vadd.f32 %v682, %v986
        %v988 = vpop.f32.mrb[0].mxu0
        %989 = vdwg.mxu0
        %s990 = scalar_lea.vmem %s269, 16
        %v991 = vld [vmem:[%s990] sm:$0xf]
        %v992 = vld [vmem:[%s990 + $0x4] sm:$0xf]
        %v993 = vld [vmem:[%s990 + $0x8] sm:$0xf]
        %v994 = vld [vmem:[%s990 + $0xc] sm:$0xf]
        %v995 = vld [vmem:[%s990 + $0x10] sm:$0xf]
        %v996 = vld [vmem:[%s990 + $0x14] sm:$0xf]
        %v997 = vld [vmem:[%s990 + $0x18] sm:$0xf]
        %v998 = vld [vmem:[%s990 + $0x1c] sm:$0xf]
        %v999 = vld [vmem:[%s990 + $0x20] sm:$0xf]
        %v1000 = vld [vmem:[%s990 + $0x24] sm:$0xf]
        %v1001 = vld [vmem:[%s990 + $0x28] sm:$0xf]
        %v1002 = vld [vmem:[%s990 + $0x2c] sm:$0xf]
        %v1003 = vld [vmem:[%s990 + $0x30] sm:$0xf]
        %v1004 = vld [vmem:[%s990 + $0x34] sm:$0xf]
        %v1005 = vld [vmem:[%s990 + $0x38] sm:$0xf]
        %v1006 = vld [vmem:[%s990 + $0x3c] sm:$0xf]
        %v1007 = vld [vmem:[%s990 + $0x40] sm:$0xf]
        %v1008 = vld [vmem:[%s990 + $0x44] sm:$0xf]
        %v1009 = vld [vmem:[%s990 + $0x48] sm:$0xf]
        %v1010 = vld [vmem:[%s990 + $0x4c] sm:$0xf]
        %v1011 = vld [vmem:[%s990 + $0x50] sm:$0xf]
        %v1012 = vld [vmem:[%s990 + $0x54] sm:$0xf]
        %v1013 = vld [vmem:[%s990 + $0x58] sm:$0xf]
        %v1014 = vld [vmem:[%s990 + $0x5c] sm:$0xf]
        %v1015 = vld [vmem:[%s990 + $0x60] sm:$0xf]
        %v1016 = vld [vmem:[%s990 + $0x64] sm:$0xf]
        %v1017 = vld [vmem:[%s990 + $0x68] sm:$0xf]
        %v1018 = vld [vmem:[%s990 + $0x6c] sm:$0xf]
        %v1019 = vld [vmem:[%s990 + $0x70] sm:$0xf]
        %v1020 = vld [vmem:[%s990 + $0x74] sm:$0xf]
        %v1021 = vld [vmem:[%s990 + $0x78] sm:$0xf]
        %v1022 = vld [vmem:[%s990 + $0x7c] sm:$0xf]
        %s1023 = scalar_lea.vmem %s1, 128
        %v1024 = vld [vmem:[%s1023] sm:$0xf]
        %v1025 = vld [vmem:[%s1023 + $0x4] sm:$0xf]
        %v1026 = vld [vmem:[%s1023 + $0x8] sm:$0xf]
        %v1027 = vld [vmem:[%s1023 + $0xc] sm:$0xf]
        %v1028 = vld [vmem:[%s1023 + $0x10] sm:$0xf]
        %v1029 = vld [vmem:[%s1023 + $0x14] sm:$0xf]
        %v1030 = vld [vmem:[%s1023 + $0x18] sm:$0xf]
        %v1031 = vld [vmem:[%s1023 + $0x1c] sm:$0xf]
        %v1032 = vld [vmem:[%s1023 + $0x20] sm:$0xf]
        %v1033 = vld [vmem:[%s1023 + $0x24] sm:$0xf]
        %v1034 = vld [vmem:[%s1023 + $0x28] sm:$0xf]
        %v1035 = vld [vmem:[%s1023 + $0x2c] sm:$0xf]
        %v1036 = vld [vmem:[%s1023 + $0x30] sm:$0xf]
        %v1037 = vld [vmem:[%s1023 + $0x34] sm:$0xf]
        %v1038 = vld [vmem:[%s1023 + $0x38] sm:$0xf]
        %v1039 = vld [vmem:[%s1023 + $0x3c] sm:$0xf]
        %v1072 = vunpack.c.l.b16 %v991
        %v1073 = vunpack.c.l.b16 %v992
        %v1074 = vunpack.c.l.b16 %v993
        %v1075 = vunpack.c.l.b16 %v994
        %v1076 = vunpack.c.l.b16 %v995
        %v1077 = vunpack.c.l.b16 %v996
        %v1078 = vunpack.c.l.b16 %v997
        %v1079 = vunpack.c.l.b16 %v998
        %v1080 = vunpack.c.l.b16 %v999
        %v1081 = vunpack.c.l.b16 %v1000
        %v1082 = vunpack.c.l.b16 %v1001
        %v1083 = vunpack.c.l.b16 %v1002
        %v1084 = vunpack.c.l.b16 %v1003
        %v1085 = vunpack.c.l.b16 %v1004
        %v1086 = vunpack.c.l.b16 %v1005
        %v1087 = vunpack.c.l.b16 %v1006
        %v1088 = vunpack.c.l.b16 %v1007
        %v1089 = vunpack.c.l.b16 %v1008
        %v1090 = vunpack.c.l.b16 %v1009
        %v1091 = vunpack.c.l.b16 %v1010
        %v1092 = vunpack.c.l.b16 %v1011
        %v1093 = vunpack.c.l.b16 %v1012
        %v1094 = vunpack.c.l.b16 %v1013
        %v1095 = vunpack.c.l.b16 %v1014
        %v1096 = vunpack.c.l.b16 %v1015
        %v1097 = vunpack.c.l.b16 %v1016
        %v1098 = vunpack.c.l.b16 %v1017
        %v1099 = vunpack.c.l.b16 %v1018
        %v1100 = vunpack.c.l.b16 %v1019
        %v1101 = vunpack.c.l.b16 %v1020
        %v1102 = vunpack.c.l.b16 %v1021
        %v1103 = vunpack.c.l.b16 %v1022
        %v1104 = vpack.c.b16 %v1073, %v1072
        %v1105 = vpack.c.b16 %v1075, %v1074
        %v1106 = vpack.c.b16 %v1077, %v1076
        %v1107 = vpack.c.b16 %v1079, %v1078
        %v1108 = vpack.c.b16 %v1081, %v1080
        %v1109 = vpack.c.b16 %v1083, %v1082
        %v1110 = vpack.c.b16 %v1085, %v1084
        %v1111 = vpack.c.b16 %v1087, %v1086
        %v1112 = vpack.c.b16 %v1089, %v1088
        %v1113 = vpack.c.b16 %v1091, %v1090
        %v1114 = vpack.c.b16 %v1093, %v1092
        %v1115 = vpack.c.b16 %v1095, %v1094
        %v1116 = vpack.c.b16 %v1097, %v1096
        %v1117 = vpack.c.b16 %v1099, %v1098
        %v1118 = vpack.c.b16 %v1101, %v1100
        %v1119 = vpack.c.b16 %v1103, %v1102
        %v1152 = vunpack.c.l.b16 %v1024
        %v1153 = vunpack.c.l.b16 %v1025
        %v1154 = vunpack.c.l.b16 %v1026
        %v1155 = vunpack.c.l.b16 %v1027
        %v1156 = vunpack.c.l.b16 %v1028
        %v1157 = vunpack.c.l.b16 %v1029
        %v1158 = vunpack.c.l.b16 %v1030
        %v1159 = vunpack.c.l.b16 %v1031
        %v1160 = vunpack.c.l.b16 %v1032
        %v1161 = vunpack.c.l.b16 %v1033
        %v1162 = vunpack.c.l.b16 %v1034
        %v1163 = vunpack.c.l.b16 %v1035
        %v1164 = vunpack.c.l.b16 %v1036
        %v1165 = vunpack.c.l.b16 %v1037
        %v1166 = vunpack.c.l.b16 %v1038
        %v1167 = vunpack.c.l.b16 %v1039
        %v1168 = vpack.c.b16 %v1153, %v1152
        %v1169 = vpack.c.b16 %v1155, %v1154
        %v1170 = vpack.c.b16 %v1157, %v1156
        %v1171 = vpack.c.b16 %v1159, %v1158
        %v1172 = vpack.c.b16 %v1161, %v1160
        %v1173 = vpack.c.b16 %v1163, %v1162
        %v1174 = vpack.c.b16 %v1165, %v1164
        %v1175 = vpack.c.b16 %v1167, %v1166
        %1184 = vmatprep.subr.bf16.mxu0 0
        %1185 = vmatpush1.bf16.msra.mxu0 %v1168
        %1186 = vmatprep.subr.bf16.mxu0 0
        %1187 = vmatpush1.bf16.msra.mxu0 %v1169
        %1188 = vmatprep.subr.bf16.mxu0 0
        %1189 = vmatpush1.bf16.msra.mxu0 %v1170
        %1190 = vmatprep.subr.bf16.mxu0 0
        %1191 = vmatpush1.bf16.msra.mxu0 %v1171
        %1192 = vmatprep.subr.bf16.mxu0 0
        %1193 = vmatpush1.bf16.msra.mxu0 %v1172
        %1194 = vmatprep.subr.bf16.mxu0 0
        %1195 = vmatpush1.bf16.msra.mxu0 %v1173
        %1196 = vmatprep.subr.bf16.mxu0 0
        %1197 = vmatpush1.bf16.msra.mxu0 %v1174
        %1198 = vmatprep.subr.bf16.mxu0 0
        %1199 = vmatpush1.bf16.msra.mxu0 %v1175
        %1200 = vmatprep.subr.bf16.mxu0 0
        %1201 = vmatpush1.bf16.msra.mxu0 0
        %1202 = vmatprep.subr.bf16.mxu0 0
        %1203 = vmatpush1.bf16.msra.mxu0 0
        %1204 = vmatprep.subr.bf16.mxu0 0
        %1205 = vmatpush1.bf16.msra.mxu0 0
        %1206 = vmatprep.subr.bf16.mxu0 0
        %1207 = vmatpush1.bf16.msra.mxu0 0
        %1208 = vmatprep.subr.bf16.mxu0 0
        %1209 = vmatpush1.bf16.msra.mxu0 0
        %1210 = vmatprep.subr.bf16.mxu0 0
        %1211 = vmatpush1.bf16.msra.mxu0 0
        %1212 = vmatprep.subr.bf16.mxu0 0
        %1213 = vmatpush1.bf16.msra.mxu0 0
        %1214 = vmatprep.subr.bf16.mxu0 0
        %1215 = vmatpush1.bf16.msra.mxu0 0
        %1216 = vmatprep.mubr.bf16.mxu0 0
        %1217 = vmatmul.mubr.bf16.gmra.mrb[0].mxu0 %v1104
        %v1218 = vpop.f32.mrb[0].mxu0
        %v1219 = vadd.f32 0.0, %v1218
        %v1220 = vpop.f32.mrb[0].mxu0
        %v1221 = vpop.f32.mrb[0].mxu0
        %v1222 = vadd.f32 0.0, %v1221
        %v1223 = vpop.f32.mrb[0].mxu0
        %1224 = vmatprep.mubr.bf16.mxu0 0
        %1225 = vmatmul.mubr.bf16.gmra.mrb[0].mxu0 %v1105
        %v1226 = vpop.f32.mrb[0].mxu0
        %v1227 = vadd.f32 0.0, %v1226
        %v1228 = vpop.f32.mrb[0].mxu0
        %v1229 = vpop.f32.mrb[0].mxu0
        %v1230 = vadd.f32 0.0, %v1229
        %v1231 = vpop.f32.mrb[0].mxu0
        %1232 = vmatprep.mubr.bf16.mxu0 0
        %1233 = vmatmul.mubr.bf16.gmra.mrb[0].mxu0 %v1106
        %v1234 = vpop.f32.mrb[0].mxu0
        %v1235 = vadd.f32 0.0, %v1234
        %v1236 = vpop.f32.mrb[0].mxu0
        %v1237 = vpop.f32.mrb[0].mxu0
        %v1238 = vadd.f32 0.0, %v1237
        %v1239 = vpop.f32.mrb[0].mxu0
        %1240 = vmatprep.mubr.bf16.mxu0 0
        %1241 = vmatmul.mubr.bf16.gmra.mrb[0].mxu0 %v1107
        %v1242 = vpop.f32.mrb[0].mxu0
        %v1243 = vadd.f32 0.0, %v1242
        %v1244 = vpop.f32.mrb[0].mxu0
        %v1245 = vpop.f32.mrb[0].mxu0
        %v1246 = vadd.f32 0.0, %v1245
        %v1247 = vpop.f32.mrb[0].mxu0
        %1248 = vmatprep.mubr.bf16.mxu0 0
        %1249 = vmatmul.mubr.bf16.gmra.mrb[0].mxu0 %v1108
        %v1250 = vpop.f32.mrb[0].mxu0
        %v1251 = vadd.f32 0.0, %v1250
        %v1252 = vpop.f32.mrb[0].mxu0
        %v1253 = vpop.f32.mrb[0].mxu0
        %v1254 = vadd.f32 0.0, %v1253
        %v1255 = vpop.f32.mrb[0].mxu0
        %1256 = vmatprep.mubr.bf16.mxu0 0
        %1257 = vmatmul.mubr.bf16.gmra.mrb[0].mxu0 %v1109
        %v1258 = vpop.f32.mrb[0].mxu0
        %v1259 = vadd.f32 0.0, %v1258
        %v1260 = vpop.f32.mrb[0].mxu0
        %v1261 = vpop.f32.mrb[0].mxu0
        %v1262 = vadd.f32 0.0, %v1261
        %v1263 = vpop.f32.mrb[0].mxu0
        %1264 = vmatprep.mubr.bf16.mxu0 0
        %1265 = vmatmul.mubr.bf16.gmra.mrb[0].mxu0 %v1110
        %v1266 = vpop.f32.mrb[0].mxu0
        %v1267 = vadd.f32 0.0, %v1266
        %v1268 = vpop.f32.mrb[0].mxu0
        %v1269 = vpop.f32.mrb[0].mxu0
        %v1270 = vadd.f32 0.0, %v1269
        %v1271 = vpop.f32.mrb[0].mxu0
        %1272 = vmatprep.mubr.bf16.mxu0 0
        %1273 = vmatmul.mubr.bf16.gmra.mrb[0].mxu0 %v1111
        %v1274 = vpop.f32.mrb[0].mxu0
        %v1275 = vadd.f32 0.0, %v1274
        %v1276 = vpop.f32.mrb[0].mxu0
        %v1277 = vpop.f32.mrb[0].mxu0
        %v1278 = vadd.f32 0.0, %v1277
        %v1279 = vpop.f32.mrb[0].mxu0
        %1280 = vmatprep.mubr.bf16.mxu0 0
        %1281 = vmatmul.mubr.bf16.gmra.mrb[0].mxu0 %v1112
        %v1282 = vpop.f32.mrb[0].mxu0
        %v1283 = vadd.f32 0.0, %v1282
        %v1284 = vpop.f32.mrb[0].mxu0
        %v1285 = vpop.f32.mrb[0].mxu0
        %v1286 = vadd.f32 0.0, %v1285
        %v1287 = vpop.f32.mrb[0].mxu0
        %1288 = vmatprep.mubr.bf16.mxu0 0
        %1289 = vmatmul.mubr.bf16.gmra.mrb[0].mxu0 %v1113
        %v1290 = vpop.f32.mrb[0].mxu0
        %v1291 = vadd.f32 0.0, %v1290
        %v1292 = vpop.f32.mrb[0].mxu0
        %v1293 = vpop.f32.mrb[0].mxu0
        %v1294 = vadd.f32 0.0, %v1293
        %v1295 = vpop.f32.mrb[0].mxu0
        %1296 = vmatprep.mubr.bf16.mxu0 0
        %1297 = vmatmul.mubr.bf16.gmra.mrb[0].mxu0 %v1114
        %v1298 = vpop.f32.mrb[0].mxu0
        %v1299 = vadd.f32 0.0, %v1298
        %v1300 = vpop.f32.mrb[0].mxu0
        %v1301 = vpop.f32.mrb[0].mxu0
        %v1302 = vadd.f32 0.0, %v1301
        %v1303 = vpop.f32.mrb[0].mxu0
        %1304 = vmatprep.mubr.bf16.mxu0 0
        %1305 = vmatmul.mubr.bf16.gmra.mrb[0].mxu0 %v1115
        %v1306 = vpop.f32.mrb[0].mxu0
        %v1307 = vadd.f32 0.0, %v1306
        %v1308 = vpop.f32.mrb[0].mxu0
        %v1309 = vpop.f32.mrb[0].mxu0
        %v1310 = vadd.f32 0.0, %v1309
        %v1311 = vpop.f32.mrb[0].mxu0
        %1312 = vmatprep.mubr.bf16.mxu0 0
        %1313 = vmatmul.mubr.bf16.gmra.mrb[0].mxu0 %v1116
        %v1314 = vpop.f32.mrb[0].mxu0
        %v1315 = vadd.f32 0.0, %v1314
        %v1316 = vpop.f32.mrb[0].mxu0
        %v1317 = vpop.f32.mrb[0].mxu0
        %v1318 = vadd.f32 0.0, %v1317
        %v1319 = vpop.f32.mrb[0].mxu0
        %1320 = vmatprep.mubr.bf16.mxu0 0
        %1321 = vmatmul.mubr.bf16.gmra.mrb[0].mxu0 %v1117
        %v1322 = vpop.f32.mrb[0].mxu0
        %v1323 = vadd.f32 0.0, %v1322
        %v1324 = vpop.f32.mrb[0].mxu0
        %v1325 = vpop.f32.mrb[0].mxu0
        %v1326 = vadd.f32 0.0, %v1325
        %v1327 = vpop.f32.mrb[0].mxu0
        %1328 = vmatprep.mubr.bf16.mxu0 0
        %1329 = vmatmul.mubr.bf16.gmra.mrb[0].mxu0 %v1118
        %v1330 = vpop.f32.mrb[0].mxu0
        %v1331 = vadd.f32 0.0, %v1330
        %v1332 = vpop.f32.mrb[0].mxu0
        %v1333 = vpop.f32.mrb[0].mxu0
        %v1334 = vadd.f32 0.0, %v1333
        %v1335 = vpop.f32.mrb[0].mxu0
        %1336 = vmatprep.mubr.bf16.mxu0 0
        %1337 = vmatmul.mubr.bf16.gmra.mrb[0].mxu0 %v1119
        %v1338 = vpop.f32.mrb[0].mxu0
        %v1339 = vadd.f32 0.0, %v1338
        %v1340 = vpop.f32.mrb[0].mxu0
        %v1341 = vpop.f32.mrb[0].mxu0
        %v1342 = vadd.f32 0.0, %v1341
        %v1343 = vpop.f32.mrb[0].mxu0
        %1344 = vdwg.mxu0
        %v1345 = vadd.f32 %v864, %v1219
        %v1346 = vadd.f32 %v867, %v1222
        %v1347 = vadd.f32 %v872, %v1227
        %v1348 = vadd.f32 %v875, %v1230
        %v1349 = vadd.f32 %v880, %v1235
        %v1350 = vadd.f32 %v883, %v1238
        %v1351 = vadd.f32 %v888, %v1243
        %v1352 = vadd.f32 %v891, %v1246
        %v1353 = vadd.f32 %v896, %v1251
        %v1354 = vadd.f32 %v899, %v1254
        %v1355 = vadd.f32 %v904, %v1259
        %v1356 = vadd.f32 %v907, %v1262
        %v1357 = vadd.f32 %v912, %v1267
        %v1358 = vadd.f32 %v915, %v1270
        %v1359 = vadd.f32 %v920, %v1275
        %v1360 = vadd.f32 %v923, %v1278
        %v1361 = vadd.f32 %v928, %v1283
        %v1362 = vadd.f32 %v931, %v1286
        %v1363 = vadd.f32 %v936, %v1291
        %v1364 = vadd.f32 %v939, %v1294
        %v1365 = vadd.f32 %v944, %v1299
        %v1366 = vadd.f32 %v947, %v1302
        %v1367 = vadd.f32 %v952, %v1307
        %v1368 = vadd.f32 %v955, %v1310
        %v1369 = vadd.f32 %v960, %v1315
        %v1370 = vadd.f32 %v963, %v1318
        %v1371 = vadd.f32 %v968, %v1323
        %v1372 = vadd.f32 %v971, %v1326
        %v1373 = vadd.f32 %v976, %v1331
        %v1374 = vadd.f32 %v979, %v1334
        %v1375 = vadd.f32 %v984, %v1339
        %v1376 = vadd.f32 %v987, %v1342
        %v1377 = vld [vmem:[#allocation2] sm:$0x1]
        %v1379 = vlaneseq
        %v1380 = vshrl.u32 %v1379, 7
        %v1381 = vsub.s32 0, %v1380
        %v1382 = vrot.slane %v1377, %v1381
        %v1384 = vadd.f32 %v1345, %v1382
        %v1385 = vadd.f32 %v1346, %v1382
        %v1386 = vadd.f32 %v1347, %v1382
        %v1387 = vadd.f32 %v1348, %v1382
        %v1388 = vadd.f32 %v1349, %v1382
        %v1389 = vadd.f32 %v1350, %v1382
        %v1390 = vadd.f32 %v1351, %v1382
        %v1391 = vadd.f32 %v1352, %v1382
        %v1392 = vadd.f32 %v1353, %v1382
        %v1393 = vadd.f32 %v1354, %v1382
        %v1394 = vadd.f32 %v1355, %v1382
        %v1395 = vadd.f32 %v1356, %v1382
        %v1396 = vadd.f32 %v1357, %v1382
        %v1397 = vadd.f32 %v1358, %v1382
        %v1398 = vadd.f32 %v1359, %v1382
        %v1399 = vadd.f32 %v1360, %v1382
        %v1400 = vadd.f32 %v1361, %v1382
        %v1401 = vadd.f32 %v1362, %v1382
        %v1402 = vadd.f32 %v1363, %v1382
        %v1403 = vadd.f32 %v1364, %v1382
        %v1404 = vadd.f32 %v1365, %v1382
        %v1405 = vadd.f32 %v1366, %v1382
        %v1406 = vadd.f32 %v1367, %v1382
        %v1407 = vadd.f32 %v1368, %v1382
        %v1408 = vadd.f32 %v1369, %v1382
        %v1409 = vadd.f32 %v1370, %v1382
        %v1410 = vadd.f32 %v1371, %v1382
        %v1411 = vadd.f32 %v1372, %v1382
        %v1412 = vadd.f32 %v1373, %v1382
        %v1413 = vadd.f32 %v1374, %v1382
        %v1414 = vadd.f32 %v1375, %v1382
        %v1415 = vadd.f32 %v1376, %v1382
        %v1416 = vmax.f32 %v1384, 0.0
        %v1417 = vmax.f32 %v1385, 0.0
        %v1418 = vmax.f32 %v1386, 0.0
        %v1419 = vmax.f32 %v1387, 0.0
        %v1420 = vmax.f32 %v1388, 0.0
        %v1421 = vmax.f32 %v1389, 0.0
        %v1422 = vmax.f32 %v1390, 0.0
        %v1423 = vmax.f32 %v1391, 0.0
        %v1424 = vmax.f32 %v1392, 0.0
        %v1425 = vmax.f32 %v1393, 0.0
        %v1426 = vmax.f32 %v1394, 0.0
        %v1427 = vmax.f32 %v1395, 0.0
        %v1428 = vmax.f32 %v1396, 0.0
        %v1429 = vmax.f32 %v1397, 0.0
        %v1430 = vmax.f32 %v1398, 0.0
        %v1431 = vmax.f32 %v1399, 0.0
        %v1432 = vmax.f32 %v1400, 0.0
        %v1433 = vmax.f32 %v1401, 0.0
        %v1434 = vmax.f32 %v1402, 0.0
        %v1435 = vmax.f32 %v1403, 0.0
        %v1436 = vmax.f32 %v1404, 0.0
        %v1437 = vmax.f32 %v1405, 0.0
        %v1438 = vmax.f32 %v1406, 0.0
        %v1439 = vmax.f32 %v1407, 0.0
        %v1440 = vmax.f32 %v1408, 0.0
        %v1441 = vmax.f32 %v1409, 0.0
        %v1442 = vmax.f32 %v1410, 0.0
        %v1443 = vmax.f32 %v1411, 0.0
        %v1444 = vmax.f32 %v1412, 0.0
        %v1445 = vmax.f32 %v1413, 0.0
        %v1446 = vmax.f32 %v1414, 0.0
        %v1447 = vmax.f32 %v1415, 0.0
        %v1448 = vpack.c.bf16 %v1417, %v1416
        %v1449 = vpack.c.bf16 %v1419, %v1418
        %v1450 = vpack.c.bf16 %v1421, %v1420
        %v1451 = vpack.c.bf16 %v1423, %v1422
        %v1452 = vpack.c.bf16 %v1425, %v1424
        %v1453 = vpack.c.bf16 %v1427, %v1426
        %v1454 = vpack.c.bf16 %v1429, %v1428
        %v1455 = vpack.c.bf16 %v1431, %v1430
        %v1456 = vpack.c.bf16 %v1433, %v1432
        %v1457 = vpack.c.bf16 %v1435, %v1434
        %v1458 = vpack.c.bf16 %v1437, %v1436
        %v1459 = vpack.c.bf16 %v1439, %v1438
        %v1460 = vpack.c.bf16 %v1441, %v1440
        %v1461 = vpack.c.bf16 %v1443, %v1442
        %v1462 = vpack.c.bf16 %v1445, %v1444
        %v1463 = vpack.c.bf16 %v1447, %v1446
        %v1464 = vld [vmem:[%s3] sm:$0xf]
        %v1465 = vld [vmem:[%s3 + $0x4] sm:$0xf]
        %v1466 = vld [vmem:[%s3 + $0x8] sm:$0xf]
        %v1467 = vld [vmem:[%s3 + $0xc] sm:$0xf]
        %v1468 = vld [vmem:[#allocation4] sm:$0x1]
        %v1470 = vlaneseq
        %v1471 = vshrl.u32 %v1470, 7
        %v1472 = vsub.s32 0, %v1471
        %v1473 = vrot.slane %v1468, %v1472
        %v1479 = vunpack.c.l.b16 %v1464
        %v1480 = vunpack.c.l.b16 %v1465
        %v1481 = vunpack.c.l.b16 %v1466
        %v1482 = vunpack.c.l.b16 %v1467
        %v1483 = vpack.c.b16 %v1480, %v1479
        %v1484 = vpack.c.b16 %v1482, %v1481
        %vm1487 = vcmask 261120
        %v1489 = vsel %vm1487, %v1448, 0
        %v1492 = vsel %vm1487, %v1449, 0
        %v1495 = vsel %vm1487, %v1450, 0
        %v1498 = vsel %vm1487, %v1451, 0
        %v1501 = vsel %vm1487, %v1452, 0
        %v1504 = vsel %vm1487, %v1453, 0
        %v1507 = vsel %vm1487, %v1454, 0
        %v1510 = vsel %vm1487, %v1455, 0
        %v1513 = vsel %vm1487, %v1456, 0
        %v1516 = vsel %vm1487, %v1457, 0
        %v1519 = vsel %vm1487, %v1458, 0
        %v1522 = vsel %vm1487, %v1459, 0
        %v1525 = vsel %vm1487, %v1460, 0
        %v1528 = vsel %vm1487, %v1461, 0
        %v1531 = vsel %vm1487, %v1462, 0
        %v1534 = vsel %vm1487, %v1463, 0
        %1536 = vmatprep.subr.bf16.mxu0 0
        %1537 = vmatpush1.bf16.msra.mxu0 %v1483
        %1538 = vmatprep.subr.bf16.mxu0 0
        %1539 = vmatpush1.bf16.msra.mxu0 %v1484
        %1540 = vmatprep.subr.bf16.mxu0 0
        %1541 = vmatpush1.bf16.msra.mxu0 0
        %1542 = vmatprep.subr.bf16.mxu0 0
        %1543 = vmatpush1.bf16.msra.mxu0 0
        %1544 = vmatprep.subr.bf16.mxu0 0
        %1545 = vmatpush1.bf16.msra.mxu0 0
        %1546 = vmatprep.subr.bf16.mxu0 0
        %1547 = vmatpush1.bf16.msra.mxu0 0
        %1548 = vmatprep.subr.bf16.mxu0 0
        %1549 = vmatpush1.bf16.msra.mxu0 0
        %1550 = vmatprep.subr.bf16.mxu0 0
        %1551 = vmatpush1.bf16.msra.mxu0 0
        %1552 = vmatprep.subr.bf16.mxu0 0
        %1553 = vmatpush1.bf16.msra.mxu0 0
        %1554 = vmatprep.subr.bf16.mxu0 0
        %1555 = vmatpush1.bf16.msra.mxu0 0
        %1556 = vmatprep.subr.bf16.mxu0 0
        %1557 = vmatpush1.bf16.msra.mxu0 0
        %1558 = vmatprep.subr.bf16.mxu0 0
        %1559 = vmatpush1.bf16.msra.mxu0 0
        %1560 = vmatprep.subr.bf16.mxu0 0
        %1561 = vmatpush1.bf16.msra.mxu0 0
        %1562 = vmatprep.subr.bf16.mxu0 0
        %1563 = vmatpush1.bf16.msra.mxu0 0
        %1564 = vmatprep.subr.bf16.mxu0 0
        %1565 = vmatpush1.bf16.msra.mxu0 0
        %1566 = vmatprep.subr.bf16.mxu0 0
        %1567 = vmatpush1.bf16.msra.mxu0 0
        %1568 = vmatprep.mubr.bf16.mxu0 0
        %1569 = vmatmul.mubr.bf16.gmra.mrb[0].mxu0 %v1489
        %v1570 = vpop.f32.mrb[0].mxu0
        %v1571 = vadd.f32 %v1473, %v1570
        %v1572 = vpop.f32.mrb[0].mxu0
        %v1573 = vpop.f32.mrb[0].mxu0
        %v1574 = vadd.f32 %v1473, %v1573
        %v1575 = vpop.f32.mrb[0].mxu0
        %1576 = vmatprep.mubr.bf16.mxu0 0
        %1577 = vmatmul.mubr.bf16.gmra.mrb[0].mxu0 %v1492
        %v1578 = vpop.f32.mrb[0].mxu0
        %v1579 = vadd.f32 %v1473, %v1578
        %v1580 = vpop.f32.mrb[0].mxu0
        %v1581 = vpop.f32.mrb[0].mxu0
        %v1582 = vadd.f32 %v1473, %v1581
        %v1583 = vpop.f32.mrb[0].mxu0
        %1584 = vmatprep.mubr.bf16.mxu0 0
        %1585 = vmatmul.mubr.bf16.gmra.mrb[0].mxu0 %v1495
        %v1586 = vpop.f32.mrb[0].mxu0
        %v1587 = vadd.f32 %v1473, %v1586
        %v1588 = vpop.f32.mrb[0].mxu0
        %v1589 = vpop.f32.mrb[0].mxu0
        %v1590 = vadd.f32 %v1473, %v1589
        %v1591 = vpop.f32.mrb[0].mxu0
        %1592 = vmatprep.mubr.bf16.mxu0 0
        %1593 = vmatmul.mubr.bf16.gmra.mrb[0].mxu0 %v1498
        %v1594 = vpop.f32.mrb[0].mxu0
        %v1595 = vadd.f32 %v1473, %v1594
        %v1596 = vpop.f32.mrb[0].mxu0
        %v1597 = vpop.f32.mrb[0].mxu0
        %v1598 = vadd.f32 %v1473, %v1597
        %v1599 = vpop.f32.mrb[0].mxu0
        %1600 = vmatprep.mubr.bf16.mxu0 0
        %1601 = vmatmul.mubr.bf16.gmra.mrb[0].mxu0 %v1501
        %v1602 = vpop.f32.mrb[0].mxu0
        %v1603 = vadd.f32 %v1473, %v1602
        %v1604 = vpop.f32.mrb[0].mxu0
        %v1605 = vpop.f32.mrb[0].mxu0
        %v1606 = vadd.f32 %v1473, %v1605
        %v1607 = vpop.f32.mrb[0].mxu0
        %1608 = vmatprep.mubr.bf16.mxu0 0
        %1609 = vmatmul.mubr.bf16.gmra.mrb[0].mxu0 %v1504
        %v1610 = vpop.f32.mrb[0].mxu0
        %v1611 = vadd.f32 %v1473, %v1610
        %v1612 = vpop.f32.mrb[0].mxu0
        %v1613 = vpop.f32.mrb[0].mxu0
        %v1614 = vadd.f32 %v1473, %v1613
        %v1615 = vpop.f32.mrb[0].mxu0
        %1616 = vmatprep.mubr.bf16.mxu0 0
        %1617 = vmatmul.mubr.bf16.gmra.mrb[0].mxu0 %v1507
        %v1618 = vpop.f32.mrb[0].mxu0
        %v1619 = vadd.f32 %v1473, %v1618
        %v1620 = vpop.f32.mrb[0].mxu0
        %v1621 = vpop.f32.mrb[0].mxu0
        %v1622 = vadd.f32 %v1473, %v1621
        %v1623 = vpop.f32.mrb[0].mxu0
        %1624 = vmatprep.mubr.bf16.mxu0 0
        %1625 = vmatmul.mubr.bf16.gmra.mrb[0].mxu0 %v1510
        %v1626 = vpop.f32.mrb[0].mxu0
        %v1627 = vadd.f32 %v1473, %v1626
        %v1628 = vpop.f32.mrb[0].mxu0
        %v1629 = vpop.f32.mrb[0].mxu0
        %v1630 = vadd.f32 %v1473, %v1629
        %v1631 = vpop.f32.mrb[0].mxu0
        %1632 = vmatprep.mubr.bf16.mxu0 0
        %1633 = vmatmul.mubr.bf16.gmra.mrb[0].mxu0 %v1513
        %v1634 = vpop.f32.mrb[0].mxu0
        %v1635 = vadd.f32 %v1473, %v1634
        %v1636 = vpop.f32.mrb[0].mxu0
        %v1637 = vpop.f32.mrb[0].mxu0
        %v1638 = vadd.f32 %v1473, %v1637
        %v1639 = vpop.f32.mrb[0].mxu0
        %1640 = vmatprep.mubr.bf16.mxu0 0
        %1641 = vmatmul.mubr.bf16.gmra.mrb[0].mxu0 %v1516
        %v1642 = vpop.f32.mrb[0].mxu0
        %v1643 = vadd.f32 %v1473, %v1642
        %v1644 = vpop.f32.mrb[0].mxu0
        %v1645 = vpop.f32.mrb[0].mxu0
        %v1646 = vadd.f32 %v1473, %v1645
        %v1647 = vpop.f32.mrb[0].mxu0
        %1648 = vmatprep.mubr.bf16.mxu0 0
        %1649 = vmatmul.mubr.bf16.gmra.mrb[0].mxu0 %v1519
        %v1650 = vpop.f32.mrb[0].mxu0
        %v1651 = vadd.f32 %v1473, %v1650
        %v1652 = vpop.f32.mrb[0].mxu0
        %v1653 = vpop.f32.mrb[0].mxu0
        %v1654 = vadd.f32 %v1473, %v1653
        %v1655 = vpop.f32.mrb[0].mxu0
        %1656 = vmatprep.mubr.bf16.mxu0 0
        %1657 = vmatmul.mubr.bf16.gmra.mrb[0].mxu0 %v1522
        %v1658 = vpop.f32.mrb[0].mxu0
        %v1659 = vadd.f32 %v1473, %v1658
        %v1660 = vpop.f32.mrb[0].mxu0
        %v1661 = vpop.f32.mrb[0].mxu0
        %v1662 = vadd.f32 %v1473, %v1661
        %v1663 = vpop.f32.mrb[0].mxu0
        %1664 = vmatprep.mubr.bf16.mxu0 0
        %1665 = vmatmul.mubr.bf16.gmra.mrb[0].mxu0 %v1525
        %v1666 = vpop.f32.mrb[0].mxu0
        %v1667 = vadd.f32 %v1473, %v1666
        %v1668 = vpop.f32.mrb[0].mxu0
        %v1669 = vpop.f32.mrb[0].mxu0
        %v1670 = vadd.f32 %v1473, %v1669
        %v1671 = vpop.f32.mrb[0].mxu0
        %1672 = vmatprep.mubr.bf16.mxu0 0
        %1673 = vmatmul.mubr.bf16.gmra.mrb[0].mxu0 %v1528
        %v1674 = vpop.f32.mrb[0].mxu0
        %v1675 = vadd.f32 %v1473, %v1674
        %v1676 = vpop.f32.mrb[0].mxu0
        %v1677 = vpop.f32.mrb[0].mxu0
        %v1678 = vadd.f32 %v1473, %v1677
        %v1679 = vpop.f32.mrb[0].mxu0
        %1680 = vmatprep.mubr.bf16.mxu0 0
        %1681 = vmatmul.mubr.bf16.gmra.mrb[0].mxu0 %v1531
        %v1682 = vpop.f32.mrb[0].mxu0
        %v1683 = vadd.f32 %v1473, %v1682
        %v1684 = vpop.f32.mrb[0].mxu0
        %v1685 = vpop.f32.mrb[0].mxu0
        %v1686 = vadd.f32 %v1473, %v1685
        %v1687 = vpop.f32.mrb[0].mxu0
        %1688 = vmatprep.mubr.bf16.mxu0 0
        %1689 = vmatmul.mubr.bf16.gmra.mrb[0].mxu0 %v1534
        %v1690 = vpop.f32.mrb[0].mxu0
        %v1691 = vadd.f32 %v1473, %v1690
        %v1692 = vpop.f32.mrb[0].mxu0
        %v1693 = vpop.f32.mrb[0].mxu0
        %v1694 = vadd.f32 %v1473, %v1693
        %v1695 = vpop.f32.mrb[0].mxu0
        %1696 = vdwg.mxu0
        %v1697 = vpack.c.bf16 %v1574, %v1571
        %v1698 = vpack.c.bf16 %v1582, %v1579
        %v1699 = vpack.c.bf16 %v1590, %v1587
        %v1700 = vpack.c.bf16 %v1598, %v1595
        %v1701 = vpack.c.bf16 %v1606, %v1603
        %v1702 = vpack.c.bf16 %v1614, %v1611
        %v1703 = vpack.c.bf16 %v1622, %v1619
        %v1704 = vpack.c.bf16 %v1630, %v1627
        %v1705 = vpack.c.bf16 %v1638, %v1635
        %v1706 = vpack.c.bf16 %v1646, %v1643
        %v1707 = vpack.c.bf16 %v1654, %v1651
        %v1708 = vpack.c.bf16 %v1662, %v1659
        %v1709 = vpack.c.bf16 %v1670, %v1667
        %v1710 = vpack.c.bf16 %v1678, %v1675
        %v1711 = vpack.c.bf16 %v1686, %v1683
        %v1712 = vpack.c.bf16 %v1694, %v1691
        %v1729 = vunpack.c.l.b16 %v1697
        %v1730 = vunpack.c.h.b16 %v1697
        %v1731 = vunpack.c.l.b16 %v1698
        %v1732 = vunpack.c.h.b16 %v1698
        %v1733 = vunpack.c.l.b16 %v1699
        %v1734 = vunpack.c.h.b16 %v1699
        %v1735 = vunpack.c.l.b16 %v1700
        %v1736 = vunpack.c.h.b16 %v1700
        %v1737 = vunpack.c.l.b16 %v1701
        %v1738 = vunpack.c.h.b16 %v1701
        %v1739 = vunpack.c.l.b16 %v1702
        %v1740 = vunpack.c.h.b16 %v1702
        %v1741 = vunpack.c.l.b16 %v1703
        %v1742 = vunpack.c.h.b16 %v1703
        %v1743 = vunpack.c.l.b16 %v1704
        %v1744 = vunpack.c.h.b16 %v1704
        %v1745 = vunpack.c.l.b16 %v1705
        %v1746 = vunpack.c.h.b16 %v1705
        %v1747 = vunpack.c.l.b16 %v1706
        %v1748 = vunpack.c.h.b16 %v1706
        %v1749 = vunpack.c.l.b16 %v1707
        %v1750 = vunpack.c.h.b16 %v1707
        %v1751 = vunpack.c.l.b16 %v1708
        %v1752 = vunpack.c.h.b16 %v1708
        %v1753 = vunpack.c.l.b16 %v1709
        %v1754 = vunpack.c.h.b16 %v1709
        %v1755 = vunpack.c.l.b16 %v1710
        %v1756 = vunpack.c.h.b16 %v1710
        %v1757 = vunpack.c.l.b16 %v1711
        %v1758 = vunpack.c.h.b16 %v1711
        %v1759 = vunpack.c.l.b16 %v1712
        %v1760 = vunpack.c.h.b16 %v1712
        %v1761 = vpack.c.b16 %v1729, %v1729
        %v1762 = vpack.c.b16 %v1730, %v1730
        %v1763 = vpack.c.b16 %v1731, %v1731
        %v1764 = vpack.c.b16 %v1732, %v1732
        %v1765 = vpack.c.b16 %v1733, %v1733
        %v1766 = vpack.c.b16 %v1734, %v1734
        %v1767 = vpack.c.b16 %v1735, %v1735
        %v1768 = vpack.c.b16 %v1736, %v1736
        %v1769 = vpack.c.b16 %v1737, %v1737
        %v1770 = vpack.c.b16 %v1738, %v1738
        %v1771 = vpack.c.b16 %v1739, %v1739
        %v1772 = vpack.c.b16 %v1740, %v1740
        %v1773 = vpack.c.b16 %v1741, %v1741
        %v1774 = vpack.c.b16 %v1742, %v1742
        %v1775 = vpack.c.b16 %v1743, %v1743
        %v1776 = vpack.c.b16 %v1744, %v1744
        %v1777 = vpack.c.b16 %v1745, %v1745
        %v1778 = vpack.c.b16 %v1746, %v1746
        %v1779 = vpack.c.b16 %v1747, %v1747
        %v1780 = vpack.c.b16 %v1748, %v1748
        %v1781 = vpack.c.b16 %v1749, %v1749
        %v1782 = vpack.c.b16 %v1750, %v1750
        %v1783 = vpack.c.b16 %v1751, %v1751
        %v1784 = vpack.c.b16 %v1752, %v1752
        %v1785 = vpack.c.b16 %v1753, %v1753
        %v1786 = vpack.c.b16 %v1754, %v1754
        %v1787 = vpack.c.b16 %v1755, %v1755
        %v1788 = vpack.c.b16 %v1756, %v1756
        %v1789 = vpack.c.b16 %v1757, %v1757
        %v1790 = vpack.c.b16 %v1758, %v1758
        %v1791 = vpack.c.b16 %v1759, %v1759
        %v1792 = vpack.c.b16 %v1760, %v1760
        %1825 = vst [vmem:[%s279] sm:$0xf] %v1761
        %1826 = vst [vmem:[%s279 + $0x4] sm:$0xf] %v1762
        %1827 = vst [vmem:[%s279 + $0x8] sm:$0xf] %v1763
        %1828 = vst [vmem:[%s279 + $0xc] sm:$0xf] %v1764
        %1829 = vst [vmem:[%s279 + $0x10] sm:$0xf] %v1765
        %1830 = vst [vmem:[%s279 + $0x14] sm:$0xf] %v1766
        %1831 = vst [vmem:[%s279 + $0x18] sm:$0xf] %v1767
        %1832 = vst [vmem:[%s279 + $0x1c] sm:$0xf] %v1768
        %1833 = vst [vmem:[%s279 + $0x20] sm:$0xf] %v1769
        %1834 = vst [vmem:[%s279 + $0x24] sm:$0xf] %v1770
        %1835 = vst [vmem:[%s279 + $0x28] sm:$0xf] %v1771
        %1836 = vst [vmem:[%s279 + $0x2c] sm:$0xf] %v1772
        %1837 = vst [vmem:[%s279 + $0x30] sm:$0xf] %v1773
        %1838 = vst [vmem:[%s279 + $0x34] sm:$0xf] %v1774
        %1839 = vst [vmem:[%s279 + $0x38] sm:$0xf] %v1775
        %1840 = vst [vmem:[%s279 + $0x3c] sm:$0xf] %v1776
        %1841 = vst [vmem:[%s279 + $0x40] sm:$0xf] %v1777
        %1842 = vst [vmem:[%s279 + $0x44] sm:$0xf] %v1778
        %1843 = vst [vmem:[%s279 + $0x48] sm:$0xf] %v1779
        %1844 = vst [vmem:[%s279 + $0x4c] sm:$0xf] %v1780
        %1845 = vst [vmem:[%s279 + $0x50] sm:$0xf] %v1781
        %1846 = vst [vmem:[%s279 + $0x54] sm:$0xf] %v1782
        %1847 = vst [vmem:[%s279 + $0x58] sm:$0xf] %v1783
        %1848 = vst [vmem:[%s279 + $0x5c] sm:$0xf] %v1784
        %1849 = vst [vmem:[%s279 + $0x60] sm:$0xf] %v1785
        %1850 = vst [vmem:[%s279 + $0x64] sm:$0xf] %v1786
        %1851 = vst [vmem:[%s279 + $0x68] sm:$0xf] %v1787
        %1852 = vst [vmem:[%s279 + $0x6c] sm:$0xf] %v1788
        %1853 = vst [vmem:[%s279 + $0x70] sm:$0xf] %v1789
        %1854 = vst [vmem:[%s279 + $0x74] sm:$0xf] %v1790
        %1855 = vst [vmem:[%s279 + $0x78] sm:$0xf] %v1791
        %1856 = vst [vmem:[%s279 + $0x7c] sm:$0xf] %v1792
        %s1857 = smul.u32 32, %s23
        %p1858 = scmp.lt.s32.totalorder %s22, 1
        %s1859 = scalar_select %p1858, %s22, 1
        %p1860 = scmp.lt.s32.totalorder %s1857, 31
        %s1861 = scalar_select %p1860, %s1857, 31
        %s1862 = smul.addr %s1859, 32
        %s1863 = sadd.s32 %s1861, %s1862
        %s1864 = smul.addr %s1863, 4
        %s1865 = scalar_lea.vmem %s5, %s1864
        // Predicated region
        $region49: #{_core.1} parent=39 // pred_check
          %p1866 = pneg %p162
        $region50: #{_core.1} parent=39 // pred_check_branch
          %1868 = sbr.rel (%p1866) target = $region52
        $region51: #{_core.1} parent=39 // pred_region
          %s1869 = smul.u32 32, %s23
        $region52: #{_core.1} parent=39 // pred_fallthru
          _
      $region40: #{_core.1} parent=5 // pred_fallthru
        _
      %p1870 = scmp.le.s32.totalorder 2, %s13
      // Predicated region
      $region53: #{_core.1} parent=5 // pred_check
        %p1871 = pneg %p1870
      $region54: #{_core.1} parent=5 // pred_check_branch
        %1873 = sbr.rel (%p1871) target = $region56
      $region55: #{_core.1} parent=5 // pred_region
        %s1874 = ssub.s32 %s13, 2
        // Predicated region
        $region57: #{_core.1} parent=55 // pred_check
          %p1875 = pneg %p168
        $region58: #{_core.1} parent=55 // pred_check_branch
          %1877 = sbr.rel (%p1875) target = $region60
        $region59: #{_core.1} parent=55 // pred_region
          %s1878 = smul.u32 32, %s25
          %p1879 = scmp.lt.s32.totalorder %s24, 1
          %s1880 = scalar_select %p1879, %s24, 1
          %p1881 = scmp.lt.s32.totalorder %s1878, 31
          %s1882 = scalar_select %p1881, %s1878, 31
          %s1883 = smul.addr %s1880, 32
          %s1884 = sadd.s32 %s1882, %s1883
          %s1885 = smul.addr %s1884, 4
          %s1886 = scalar_lea.vmem %s5, %s1885
        $region60: #{_core.1} parent=55 // pred_fallthru
          _
      $region56: #{_core.1} parent=5 // pred_fallthru
        _
    $region6: #{_core.1} parent=1 // loop_footer
      %s17 = sadd.s32 1, %s13
    $region7: #{_core.1} parent=1 // loop_footer_branch
      %12 = sbr.rel target = $region3
    $region8: #{_core.1} parent=1 // loop_exit
      _
    %1887 = vsyncpa [#allocation3], 1
    %s1888 = scalar_lea.sflag [#allocation3], 1
    %1889 = vsyncpa %s1888, 1
    %1890 = vsyncpa [#allocation5], 1

</llo_original>
